<compile_context>
chip_gen: v7x
topology: tpu7x:2x2x1
jax: 0.10.0
libtpu: 0.0.40
codegen_flags: <defaults>
</compile_context>

<pallas_src>
import jax
import jax.numpy as jnp
import numpy as np
from jax.experimental import pallas as pl
from jax.experimental.pallas import tpu as pltpu


# ----------------------------------------------------------------------------
# Glue: dense symmetric-normalized adjacency, built directly at padded size.
# Duplicate edges accumulate additively (matches PyG scatter behavior).
# ----------------------------------------------------------------------------
def gcn_norm_dense_padded(edge_index, num_nodes, n_pad, dtype=jnp.bfloat16):
    row, col = edge_index[0], edge_index[1]            # source, target
    loop = jnp.arange(num_nodes, dtype=edge_index.dtype)
    row = jnp.concatenate([row, loop])
    col = jnp.concatenate([col, loop])
    w = jnp.ones(row.shape[0], dtype=jnp.float32)
    deg = jnp.zeros((num_nodes,), jnp.float32).at[col].add(w)   # in-deg incl. self-loop
    dinv = jax.lax.rsqrt(deg)                                   # deg > 0 via self-loops
    norm = dinv[row] * dinv[col] * w
    # out[i] = sum_{edges (j -> i)} norm * x[j]  =>  A[i, j] += norm
    # Single scatter into the padded slab + single cast (no extra N^2 passes).
    a = jnp.zeros((n_pad, n_pad), jnp.float32).at[col, row].add(norm)
    return a.astype(dtype)


def _round_up(v, m):
    return ((v + m - 1) // m) * m


def _pad2d(x, rows, cols, dtype):
    """Zero-pad a 2D array to (rows, cols) and cast (single pad + cast)."""
    x = x.astype(jnp.float32)
    return jnp.pad(x, ((0, rows - x.shape[0]), (0, cols - x.shape[1]))).astype(dtype)


def _pick_tile(n_pad, need_two):
    """Largest of {512,256,128} dividing n_pad; prefer >=2 tiles (megacore)."""
    if need_two:
        for t in (512, 256, 128):
            if n_pad % t == 0 and n_pad // t >= 2:
                return t
    for t in (512, 256, 128):
        if n_pad % t == 0:
            return t
    return 128


# ----------------------------------------------------------------------------
# Stage 0: node-feature projection  XW = X @ W1   (computed ONCE per node).
# ----------------------------------------------------------------------------
def project_kernel(x_ref, w_ref, o_ref):
    o_ref[...] = jnp.dot(x_ref[...], w_ref[...],
                         preferred_element_type=jnp.float32).astype(o_ref.dtype)


def project(x, w, *, tm, vmem_limit):
    n_pad, f_in = x.shape
    f_out = w.shape[1]
    return pl.pallas_call(
        project_kernel,
        out_shape=jax.ShapeDtypeStruct((n_pad, f_out), jnp.bfloat16),
        grid=(n_pad // tm,),
        in_specs=[
            pl.BlockSpec((tm, f_in), lambda i: (i, 0)),
            pl.BlockSpec((f_in, f_out), lambda i: (0, 0)),   # resident weight
        ],
        out_specs=pl.BlockSpec((tm, f_out), lambda i: (i, 0)),
        compiler_params=pltpu.CompilerParams(
            dimension_semantics=("parallel",),
            vmem_limit_bytes=vmem_limit),
    )(x, w)


# ----------------------------------------------------------------------------
# Stage 1:  HW = relu(A @ XW + b1) @ W_heads
#   Pure tiled A @ XW accumulation; the bias/ReLU/head-projection epilogue
#   runs at k==last so the full H panel never touches HBM.
# ----------------------------------------------------------------------------
def hop1_kernel(a_ref, xw_ref, b1_ref, wh_ref, o_ref, acc_ref):
    k = pl.program_id(1)

    @pl.when(k == 0)
    def _():
        acc_ref[...] = jnp.zeros_like(acc_ref)

    acc_ref[...] += jnp.dot(a_ref[...], xw_ref[...],
                            preferred_element_type=jnp.float32)

    @pl.when(k == pl.num_programs(1) - 1)
    def _():
        h = jnp.maximum(acc_ref[...] + b1_ref[...], 0.0)        # f32 epilogue
        hw = jnp.dot(h.astype(wh_ref.dtype), wh_ref[...],
                     preferred_element_type=jnp.float32)
        o_ref[...] = hw.astype(o_ref.dtype)


def gcn_hop1(a, xw, b1, w_heads, *, tm, tk, vmem_limit):
    n_pad = a.shape[0]
    hid = xw.shape[1]
    heads = w_heads.shape[1]
    return pl.pallas_call(
        hop1_kernel,
        out_shape=jax.ShapeDtypeStruct((n_pad, heads), jnp.bfloat16),
        grid=(n_pad // tm, n_pad // tk),
        in_specs=[
            pl.BlockSpec((tm, tk), lambda i, k: (i, k)),        # A tile
            pl.BlockSpec((tk, hid), lambda i, k: (k, 0)),       # XW chunk
            pl.BlockSpec((1, hid), lambda i, k: (0, 0)),        # b1 (resident)
            pl.BlockSpec((hid, heads), lambda i, k: (0, 0)),    # W_heads (resident)
        ],
        out_specs=pl.BlockSpec((tm, heads), lambda i, k: (i, 0)),
        scratch_shapes=[pltpu.VMEM((tm, hid), jnp.float32)],
        compiler_params=pltpu.CompilerParams(
            dimension_semantics=("parallel", "arbitrary"),
            vmem_limit_bytes=vmem_limit),
    )(a, xw, b1, w_heads)


# ----------------------------------------------------------------------------
# Stage 2:  OUT = A @ HW + b_heads   (pure tiled accumulation, fused heads).
# ----------------------------------------------------------------------------
def hop2_kernel(a_ref, hw_ref, bh_ref, o_ref, acc_ref):
    k = pl.program_id(1)

    @pl.when(k == 0)
    def _():
        acc_ref[...] = jnp.zeros_like(acc_ref)

    acc_ref[...] += jnp.dot(a_ref[...], hw_ref[...],
                            preferred_element_type=jnp.float32)

    @pl.when(k == pl.num_programs(1) - 1)
    def _():
        o_ref[...] = (acc_ref[...] + bh_ref[...]).astype(o_ref.dtype)


def gcn_hop2(a, hw, b_heads, *, tm, tk, vmem_limit):
    n_pad = a.shape[0]
    heads = hw.shape[1]
    return pl.pallas_call(
        hop2_kernel,
        out_shape=jax.ShapeDtypeStruct((n_pad, heads), jnp.float32),
        grid=(n_pad // tm, n_pad // tk),
        in_specs=[
            pl.BlockSpec((tm, tk), lambda i, k: (i, k)),        # A tile
            pl.BlockSpec((tk, heads), lambda i, k: (k, 0)),     # HW chunk
            pl.BlockSpec((1, heads), lambda i, k: (0, 0)),      # b_heads (resident)
        ],
        out_specs=pl.BlockSpec((tm, heads), lambda i, k: (i, 0)),
        scratch_shapes=[pltpu.VMEM((tm, heads), jnp.float32)],
        compiler_params=pltpu.CompilerParams(
            dimension_semantics=("parallel", "arbitrary"),
            vmem_limit_bytes=vmem_limit),
    )(a, hw, b_heads)


# ----------------------------------------------------------------------------
# Full encoder forward.
# ----------------------------------------------------------------------------
def encoder_forward(x, edge_index, params, *, tm=None, tk=None,
                    vmem_limit=48 * 1024 * 1024):
    """x: (N, dim_in) f32, edge_index: (2, E) int32 -> (mu, logstd) f32."""
    w1, b1, wmu, bmu, wls, bls = params
    n, dim_in = x.shape
    hid = w1.shape[1]
    dim_out = wmu.shape[1]

    n_pad = _round_up(n, 128)
    din_pad = _round_up(dim_in, 128)
    hid_pad = _round_up(hid, 128)
    heads_pad = _round_up(2 * dim_out, 128)

    # Auto tile sizes: 512-class tiles for production N, 128 for toy sizes.
    if tm is None:
        tm = _pick_tile(n_pad, need_two=True)    # >=2 row tiles for v7x megacore
    if tk is None:
        tk = _pick_tile(n_pad, need_two=False)

    # Dense normalized adjacency (dominant N^2 operand) built at padded size,
    # one scatter + one cast to bf16.
    a = gcn_norm_dense_padded(edge_index, n, n_pad, jnp.bfloat16)

    x_pad = _pad2d(x, n_pad, din_pad, jnp.bfloat16)
    w1_pad = _pad2d(w1, din_pad, hid_pad, jnp.bfloat16)
    b1_pad = _pad2d(b1, 1, hid_pad, jnp.float32)

    # Fuse mu / logstd heads into one weight / bias slab (lane-dense output).
    w_heads = jnp.concatenate([wmu, wls], axis=1)        # (hid, 2*dim_out)
    b_heads = jnp.concatenate([bmu, bls], axis=1)        # (1,   2*dim_out)
    wh_pad = _pad2d(w_heads, hid_pad, heads_pad, jnp.bfloat16)
    bh_pad = _pad2d(b_heads, 1, heads_pad, jnp.float32)

    # Stage 0: XW = X @ W1 (hoisted; computed once per node, not per row tile).
    xw = project(x_pad, w1_pad, tm=tm, vmem_limit=vmem_limit)

    # Stage 1: HW = relu(A @ XW + b1) @ W_heads (head projection fused into
    # the epilogue -> full H panel never written to HBM).
    hw = gcn_hop1(a, xw, b1_pad, wh_pad, tm=tm, tk=tk, vmem_limit=vmem_limit)

    # Stage 2: OUT = A @ HW + b_heads, f32 output.
    out = gcn_hop2(a, hw, bh_pad, tm=tm, tk=tk, vmem_limit=vmem_limit)

    mu = out[:n, :dim_out]
    logstd = out[:n, dim_out:2 * dim_out]
    return mu, logstd


# ----------------------------------------------------------------------------
# References
# ----------------------------------------------------------------------------
def _gcn_norm_f32(edge_index, num_nodes):
    row, col = edge_index[0], edge_index[1]
    loop = jnp.arange(num_nodes, dtype=edge_index.dtype)
    row = jnp.concatenate([row, loop])
    col = jnp.concatenate([col, loop])
    w = jnp.ones(row.shape[0], dtype=jnp.float32)
    deg = jnp.zeros((num_nodes,), jnp.float32).at[col].add(w)
    dinv = jax.lax.rsqrt(deg)
    norm = dinv[row] * dinv[col] * w
    return jnp.zeros((num_nodes, num_nodes), jnp.float32).at[col, row].add(norm)


def encoder_ref_f32(x, edge_index, params):
    """Pure f32 reference (original module semantics)."""
    w1, b1, wmu, bmu, wls, bls = params
    a = _gcn_norm_f32(edge_index, x.shape[0])
    h = jnp.maximum(a @ (x @ w1) + b1, 0.0)
    return a @ (h @ wmu) + bmu, a @ (h @ wls) + bls


def encoder_ref_bf16(x, edge_index, params):
    """Mirrors the kernel's mixed precision (bf16 operands, f32 accumulation)."""
    w1, b1, wmu, bmu, wls, bls = params
    a = _gcn_norm_f32(edge_index, x.shape[0]).astype(jnp.bfloat16)
    xb = x.astype(jnp.bfloat16)
    xw = jnp.dot(xb, w1.astype(jnp.bfloat16),
                 preferred_element_type=jnp.float32).astype(jnp.bfloat16)
    h = jnp.maximum(jnp.dot(a, xw, preferred_element_type=jnp.float32) + b1, 0.0)
    wh = jnp.concatenate([wmu, wls], axis=1).astype(jnp.bfloat16)
    bh = jnp.concatenate([bmu, bls], axis=1)
    hw = jnp.dot(h.astype(jnp.bfloat16), wh,
                 preferred_element_type=jnp.float32).astype(jnp.bfloat16)
    out = jnp.dot(a, hw, preferred_element_type=jnp.float32) + bh
    d = wmu.shape[1]
    return out[:, :d], out[:, d:2 * d]


if __name__ == "__main__":
    N, DIM_IN, DIM_OUT = 256, 32, 16
    HID = 2 * DIM_OUT

    key = jax.random.PRNGKey(0)
    kx, k1, k2, k3, kb1, kb2, kb3 = jax.random.split(key, 7)

    # Node features (N, dim_in)
    x = jax.random.normal(kx, (N, DIM_IN), jnp.float32)

    # Deterministic ring graph, both directions -> edge_index (2, 2N)
    src = np.arange(N, dtype=np.int32)
    dst = (src + 1) % N
    edge_index = jnp.asarray(
        np.stack([np.concatenate([src, dst]), np.concatenate([dst, src])], axis=0),
        dtype=jnp.int32)

    def glorot(k, shape):
        fan_in, fan_out = shape
        s = jnp.sqrt(6.0 / (fan_in + fan_out))
        return jax.random.uniform(k, shape, jnp.float32, -s, s)

    params = (
        glorot(k1, (DIM_IN, HID)), 0.05 * jax.random.normal(kb1, (1, HID), jnp.float32),
        glorot(k2, (HID, DIM_OUT)), 0.05 * jax.random.normal(kb2, (1, DIM_OUT), jnp.float32),
        glorot(k3, (HID, DIM_OUT)), 0.05 * jax.random.normal(kb3, (1, DIM_OUT), jnp.float32),
    )

    fwd = jax.jit(lambda xx, ei: encoder_forward(xx, ei, params))
    mu, logstd = fwd(x, edge_index)
    jax.block_until_ready((mu, logstd))
    assert mu.shape == (N, DIM_OUT) and logstd.shape == (N, DIM_OUT)

    # Strict check vs a reference with matching mixed precision.
    mu_b, ls_b = encoder_ref_bf16(x, edge_index, params)
    assert np.allclose(np.asarray(mu), np.asarray(mu_b), rtol=1e-2, atol=1e-2)
    assert np.allclose(np.asarray(logstd), np.asarray(ls_b), rtol=1e-2, atol=1e-2)

    # Loose semantic check vs the full-f32 reference (bf16 operand rounding).
    mu_r, ls_r = encoder_ref_f32(x, edge_index, params)
    assert np.allclose(np.asarray(mu), np.asarray(mu_r), rtol=1e-1, atol=1e-1)
    assert np.allclose(np.asarray(logstd), np.asarray(ls_r), rtol=1e-1, atol=1e-1)

    print("KERNEL_OK")
</pallas_src>

<mosaic_0001>
module attributes {stable_mosaic.version = 11 : i64} {
  func.func private @main(%arg0: i32) attributes {dimension_semantics = [#tpu.dimension_semantics<core_parallel>], iteration_bounds = array<i64: 2>, tpu.core_type = #tpu.core_type<sc_scalar_subcore>, window_params = []} {
    return
  }
}

module attributes {stable_mosaic.version = 11 : i64} {
  func.func private @main(%arg0: i32) attributes {dimension_semantics = [#tpu.dimension_semantics<core_parallel>], iteration_bounds = array<i64: 2>, tpu.core_type = #tpu.core_type<sc_scalar_subcore>, window_params = []} {
    return
  }
}

module attributes {stable_mosaic.version = 11 : i64} {
  func.func @project_kernel(%arg0: i32, %arg1: memref<128x128xbf16, #tpu.memory_space<vmem>>, %arg2: memref<128x128xbf16, #tpu.memory_space<vmem>>, %arg3: memref<128x128xbf16, #tpu.memory_space<vmem>>) attributes {dimension_semantics = [#tpu.dimension_semantics<parallel>], iteration_bounds = array<i64: 2>, scalar_prefetch = 0 : i64, scratch_operands = 0 : i64, tpu.core_type = #tpu.core_type<tc>, window_params = [{transform_indices = @transform_0, window_bounds = array<i64: 128, 128>}, {pipeline_mode = #tpu.pipeline_mode<synchronous>, transform_indices = @transform_1, window_bounds = array<i64: 128, 128>}, {transform_indices = @transform_2, window_bounds = array<i64: 128, 128>}]} {
    %c0 = arith.constant 0 : index
    %c0_0 = arith.constant 0 : index
    %0 = vector.load %arg1[%c0, %c0_0] : memref<128x128xbf16, #tpu.memory_space<vmem>>, vector<128x128xbf16>
    %c0_1 = arith.constant 0 : index
    %c0_2 = arith.constant 0 : index
    %1 = vector.load %arg2[%c0_1, %c0_2] : memref<128x128xbf16, #tpu.memory_space<vmem>>, vector<128x128xbf16>
    %cst = arith.constant dense<0.000000e+00> : vector<128x128xf32>
    %2 = tpu.matmul %0, %1, %cst {dimension_numbers = #tpu.dot_dimension_numbers<[1], [0], [0], [1], [0, 0, 1, 1], [], []>} : vector<128x128xbf16>, vector<128x128xbf16>, vector<128x128xf32> -> vector<128x128xf32>
    %3 = arith.truncf %2 : vector<128x128xf32> to vector<128x128xbf16>
    %c0_3 = arith.constant 0 : index
    %c0_4 = arith.constant 0 : index
    %4 = vector.load %arg3[%c0_3, %c0_4] : memref<128x128xbf16, #tpu.memory_space<vmem>>, vector<128x128xbf16>
    tpu.vector_store %arg3[%c0_3, %c0_4], %3 {strides = array<i32>} : memref<128x128xbf16, #tpu.memory_space<vmem>>, vector<128x128xbf16>,
    return
  }
  func.func @transform_0(%arg0: i32) -> (i32, i32) {
    %c0_i32 = arith.constant 0 : i32
    %c0_i32_0 = arith.constant 0 : i32
    return %arg0, %c0_i32 : i32, i32
  }
  func.func @transform_1(%arg0: i32) -> (i32, i32) {
    %c0_i32 = arith.constant 0 : i32
    %c0_i32_0 = arith.constant 0 : i32
    %c0_i32_1 = arith.constant 0 : i32
    return %c0_i32, %c0_i32_0 : i32, i32
  }
  func.func @transform_2(%arg0: i32) -> (i32, i32) {
    %c0_i32 = arith.constant 0 : i32
    %c0_i32_0 = arith.constant 0 : i32
    return %arg0, %c0_i32 : i32, i32
  }
}

module attributes {stable_mosaic.version = 11 : i64} {
  func.func @hop1_kernel(%arg0: i32, %arg1: i32, %arg2: memref<128x256xbf16, #tpu.memory_space<vmem>>, %arg3: memref<256x128xbf16, #tpu.memory_space<vmem>>, %arg4: memref<1x128xf32, #tpu.memory_space<vmem>>, %arg5: memref<128x128xbf16, #tpu.memory_space<vmem>>, %arg6: memref<128x128xbf16, #tpu.memory_space<vmem>>, %arg7: memref<128x128xf32, #tpu.memory_space<vmem>>) attributes {dimension_semantics = [#tpu.dimension_semantics<parallel>, #tpu.dimension_semantics<arbitrary>], iteration_bounds = array<i64: 2, 1>, scalar_prefetch = 0 : i64, scratch_operands = 1 : i64, tpu.core_type = #tpu.core_type<tc>, window_params = [{transform_indices = @transform_0, window_bounds = array<i64: 128, 256>}, {transform_indices = @transform_1, window_bounds = array<i64: 256, 128>}, {pipeline_mode = #tpu.pipeline_mode<synchronous>, transform_indices = @transform_2, window_bounds = array<i64: 1, 128>}, {pipeline_mode = #tpu.pipeline_mode<synchronous>, transform_indices = @transform_3, window_bounds = array<i64: 128, 128>}, {transform_indices = @transform_4, window_bounds = array<i64: 128, 128>}]} {
    %c0_i32 = arith.constant 0 : i32
    %0 = arith.cmpi eq, %arg1, %c0_i32 : i32
    %1 = arith.extui %0 : i1 to i32
    %c0_i32_0 = arith.constant 0 : i32
    %2 = arith.cmpi ne, %1, %c0_i32_0 : i32
    scf.if %2 {
      %cst_10 = arith.constant 0.000000e+00 : f32
      %12 = vector.broadcast %cst_10 : f32 to vector<128x128xf32>
      %c0_11 = arith.constant 0 : index
      %c0_12 = arith.constant 0 : index
      %13 = vector.load %arg7[%c0_11, %c0_12] : memref<128x128xf32, #tpu.memory_space<vmem>>, vector<128x128xf32>
      tpu.vector_store %arg7[%c0_11, %c0_12], %12 {strides = array<i32>} : memref<128x128xf32, #tpu.memory_space<vmem>>, vector<128x128xf32>,
    } else {
    }
    %c0 = arith.constant 0 : index
    %c0_1 = arith.constant 0 : index
    %3 = vector.load %arg7[%c0, %c0_1] : memref<128x128xf32, #tpu.memory_space<vmem>>, vector<128x128xf32>
    %c0_2 = arith.constant 0 : index
    %c0_3 = arith.constant 0 : index
    %4 = vector.load %arg2[%c0_2, %c0_3] : memref<128x256xbf16, #tpu.memory_space<vmem>>, vector<128x256xbf16>
    %c0_4 = arith.constant 0 : index
    %c0_5 = arith.constant 0 : index
    %5 = vector.load %arg3[%c0_4, %c0_5] : memref<256x128xbf16, #tpu.memory_space<vmem>>, vector<256x128xbf16>
    %cst = arith.constant dense<0.000000e+00> : vector<128x128xf32>
    %6 = tpu.matmul %4, %5, %cst {dimension_numbers = #tpu.dot_dimension_numbers<[1], [0], [0], [1], [0, 0, 1, 1], [], []>} : vector<128x256xbf16>, vector<256x128xbf16>, vector<128x128xf32> -> vector<128x128xf32>
    %7 = arith.addf %3, %6 : vector<128x128xf32>
    %c0_6 = arith.constant 0 : index
    %c0_7 = arith.constant 0 : index
    %8 = vector.load %arg7[%c0_6, %c0_7] : memref<128x128xf32, #tpu.memory_space<vmem>>, vector<128x128xf32>
    tpu.vector_store %arg7[%c0_6, %c0_7], %7 {strides = array<i32>} : memref<128x128xf32, #tpu.memory_space<vmem>>, vector<128x128xf32>,
    %c0_i32_8 = arith.constant 0 : i32
    %9 = arith.cmpi eq, %arg1, %c0_i32_8 : i32
    %10 = arith.extui %9 : i1 to i32
    %c0_i32_9 = arith.constant 0 : i32
    %11 = arith.cmpi ne, %10, %c0_i32_9 : i32
    scf.if %11 {
      %c0_10 = arith.constant 0 : index
      %c0_11 = arith.constant 0 : index
      %12 = vector.load %arg7[%c0_10, %c0_11] : memref<128x128xf32, #tpu.memory_space<vmem>>, vector<128x128xf32>
      %c0_12 = arith.constant 0 : index
      %c0_13 = arith.constant 0 : index
      %13 = vector.load %arg4[%c0_12, %c0_13] : memref<1x128xf32, #tpu.memory_space<vmem>>, vector<1x128xf32>
      %14 = vector.broadcast %13 : vector<1x128xf32> to vector<128x128xf32>
      %15 = arith.addf %12, %14 : vector<128x128xf32>
      %cst_14 = arith.constant 0.000000e+00 : f32
      %16 = vector.broadcast %cst_14 : f32 to vector<128x128xf32>
      %17 = arith.maximumf %15, %16 : vector<128x128xf32>
      %18 = arith.truncf %17 : vector<128x128xf32> to vector<128x128xbf16>
      %c0_15 = arith.constant 0 : index
      %c0_16 = arith.constant 0 : index
      %19 = vector.load %arg5[%c0_15, %c0_16] : memref<128x128xbf16, #tpu.memory_space<vmem>>, vector<128x128xbf16>
      %cst_17 = arith.constant dense<0.000000e+00> : vector<128x128xf32>
      %20 = tpu.matmul %18, %19, %cst_17 {dimension_numbers = #tpu.dot_dimension_numbers<[1], [0], [0], [1], [0, 0, 1, 1], [], []>} : vector<128x128xbf16>, vector<128x128xbf16>, vector<128x128xf32> -> vector<128x128xf32>
      %21 = arith.truncf %20 : vector<128x128xf32> to vector<128x128xbf16>
      %c0_18 = arith.constant 0 : index
      %c0_19 = arith.constant 0 : index
      %22 = vector.load %arg6[%c0_18, %c0_19] : memref<128x128xbf16, #tpu.memory_space<vmem>>, vector<128x128xbf16>
      tpu.vector_store %arg6[%c0_18, %c0_19], %21 {strides = array<i32>} : memref<128x128xbf16, #tpu.memory_space<vmem>>, vector<128x128xbf16>,
    } else {
    }
    return
  }
  func.func @transform_0(%arg0: i32, %arg1: i32) -> (i32, i32) {
    %c0_i32 = arith.constant 0 : i32
    return %arg0, %arg1 : i32, i32
  }
  func.func @transform_1(%arg0: i32, %arg1: i32) -> (i32, i32) {
    %c0_i32 = arith.constant 0 : i32
    %c0_i32_0 = arith.constant 0 : i32
    return %arg1, %c0_i32 : i32, i32
  }
  func.func @transform_2(%arg0: i32, %arg1: i32) -> (i32, i32) {
    %c0_i32 = arith.constant 0 : i32
    %c0_i32_0 = arith.constant 0 : i32
    %c0_i32_1 = arith.constant 0 : i32
    return %c0_i32, %c0_i32_0 : i32, i32
  }
  func.func @transform_3(%arg0: i32, %arg1: i32) -> (i32, i32) {
    %c0_i32 = arith.constant 0 : i32
    %c0_i32_0 = arith.constant 0 : i32
    %c0_i32_1 = arith.constant 0 : i32
    return %c0_i32, %c0_i32_0 : i32, i32
  }
  func.func @transform_4(%arg0: i32, %arg1: i32) -> (i32, i32) {
    %c0_i32 = arith.constant 0 : i32
    %c0_i32_0 = arith.constant 0 : i32
    return %arg0, %c0_i32 : i32, i32
  }
}

module attributes {stable_mosaic.version = 11 : i64} {
  func.func @hop2_kernel(%arg0: i32, %arg1: i32, %arg2: memref<128x256xbf16, #tpu.memory_space<vmem>>, %arg3: memref<256x128xbf16, #tpu.memory_space<vmem>>, %arg4: memref<1x128xf32, #tpu.memory_space<vmem>>, %arg5: memref<128x128xf32, #tpu.memory_space<vmem>>, %arg6: memref<128x128xf32, #tpu.memory_space<vmem>>) attributes {dimension_semantics = [#tpu.dimension_semantics<parallel>, #tpu.dimension_semantics<arbitrary>], iteration_bounds = array<i64: 2, 1>, scalar_prefetch = 0 : i64, scratch_operands = 1 : i64, tpu.core_type = #tpu.core_type<tc>, window_params = [{transform_indices = @transform_0, window_bounds = array<i64: 128, 256>}, {transform_indices = @transform_1, window_bounds = array<i64: 256, 128>}, {pipeline_mode = #tpu.pipeline_mode<synchronous>, transform_indices = @transform_2, window_bounds = array<i64: 1, 128>}, {transform_indices = @transform_3, window_bounds = array<i64: 128, 128>}]} {
    %c0_i32 = arith.constant 0 : i32
    %0 = arith.cmpi eq, %arg1, %c0_i32 : i32
    %1 = arith.extui %0 : i1 to i32
    %c0_i32_0 = arith.constant 0 : i32
    %2 = arith.cmpi ne, %1, %c0_i32_0 : i32
    scf.if %2 {
      %cst_10 = arith.constant 0.000000e+00 : f32
      %12 = vector.broadcast %cst_10 : f32 to vector<128x128xf32>
      %c0_11 = arith.constant 0 : index
      %c0_12 = arith.constant 0 : index
      %13 = vector.load %arg6[%c0_11, %c0_12] : memref<128x128xf32, #tpu.memory_space<vmem>>, vector<128x128xf32>
      tpu.vector_store %arg6[%c0_11, %c0_12], %12 {strides = array<i32>} : memref<128x128xf32, #tpu.memory_space<vmem>>, vector<128x128xf32>,
    } else {
    }
    %c0 = arith.constant 0 : index
    %c0_1 = arith.constant 0 : index
    %3 = vector.load %arg6[%c0, %c0_1] : memref<128x128xf32, #tpu.memory_space<vmem>>, vector<128x128xf32>
    %c0_2 = arith.constant 0 : index
    %c0_3 = arith.constant 0 : index
    %4 = vector.load %arg2[%c0_2, %c0_3] : memref<128x256xbf16, #tpu.memory_space<vmem>>, vector<128x256xbf16>
    %c0_4 = arith.constant 0 : index
    %c0_5 = arith.constant 0 : index
    %5 = vector.load %arg3[%c0_4, %c0_5] : memref<256x128xbf16, #tpu.memory_space<vmem>>, vector<256x128xbf16>
    %cst = arith.constant dense<0.000000e+00> : vector<128x128xf32>
    %6 = tpu.matmul %4, %5, %cst {dimension_numbers = #tpu.dot_dimension_numbers<[1], [0], [0], [1], [0, 0, 1, 1], [], []>} : vector<128x256xbf16>, vector<256x128xbf16>, vector<128x128xf32> -> vector<128x128xf32>
    %7 = arith.addf %3, %6 : vector<128x128xf32>
    %c0_6 = arith.constant 0 : index
    %c0_7 = arith.constant 0 : index
    %8 = vector.load %arg6[%c0_6, %c0_7] : memref<128x128xf32, #tpu.memory_space<vmem>>, vector<128x128xf32>
    tpu.vector_store %arg6[%c0_6, %c0_7], %7 {strides = array<i32>} : memref<128x128xf32, #tpu.memory_space<vmem>>, vector<128x128xf32>,
    %c0_i32_8 = arith.constant 0 : i32
    %9 = arith.cmpi eq, %arg1, %c0_i32_8 : i32
    %10 = arith.extui %9 : i1 to i32
    %c0_i32_9 = arith.constant 0 : i32
    %11 = arith.cmpi ne, %10, %c0_i32_9 : i32
    scf.if %11 {
      %c0_10 = arith.constant 0 : index
      %c0_11 = arith.constant 0 : index
      %12 = vector.load %arg6[%c0_10, %c0_11] : memref<128x128xf32, #tpu.memory_space<vmem>>, vector<128x128xf32>
      %c0_12 = arith.constant 0 : index
      %c0_13 = arith.constant 0 : index
      %13 = vector.load %arg4[%c0_12, %c0_13] : memref<1x128xf32, #tpu.memory_space<vmem>>, vector<1x128xf32>
      %14 = vector.broadcast %13 : vector<1x128xf32> to vector<128x128xf32>
      %15 = arith.addf %12, %14 : vector<128x128xf32>
      %c0_14 = arith.constant 0 : index
      %c0_15 = arith.constant 0 : index
      %16 = vector.load %arg5[%c0_14, %c0_15] : memref<128x128xf32, #tpu.memory_space<vmem>>, vector<128x128xf32>
      tpu.vector_store %arg5[%c0_14, %c0_15], %15 {strides = array<i32>} : memref<128x128xf32, #tpu.memory_space<vmem>>, vector<128x128xf32>,
    } else {
    }
    return
  }
  func.func @transform_0(%arg0: i32, %arg1: i32) -> (i32, i32) {
    %c0_i32 = arith.constant 0 : i32
    return %arg0, %arg1 : i32, i32
  }
  func.func @transform_1(%arg0: i32, %arg1: i32) -> (i32, i32) {
    %c0_i32 = arith.constant 0 : i32
    %c0_i32_0 = arith.constant 0 : i32
    return %arg1, %c0_i32 : i32, i32
  }
  func.func @transform_2(%arg0: i32, %arg1: i32) -> (i32, i32) {
    %c0_i32 = arith.constant 0 : i32
    %c0_i32_0 = arith.constant 0 : i32
    %c0_i32_1 = arith.constant 0 : i32
    return %c0_i32, %c0_i32_0 : i32, i32
  }
  func.func @transform_3(%arg0: i32, %arg1: i32) -> (i32, i32) {
    %c0_i32 = arith.constant 0 : i32
    %c0_i32_0 = arith.constant 0 : i32
    return %arg0, %c0_i32 : i32, i32
  }
}

</mosaic_0001>

<llo_original>
// kernel: mul.1
$region0: #{mul.1}
  #allocation0 [shape = 's32[1]{0}', space=sflag, size = 0x4, scoped, tag = 'scoped memory for mul.1']
  %s0 = inlined_call_operand.vmem [shape: f32[768], index: 0, kind: input, shape index: {}]
  %s1 = inlined_call_operand.vmem [shape: f32[768], index: 1, kind: input, shape index: {}]
  %s2 = inlined_call_operand.vmem [shape: f32[768], index: 2, kind: output, shape index: {}]
  %v3 = vld [vmem:[%s0] sm:$0x3f]
  %v4 = vld [vmem:[%s1] sm:$0x3f]
  %5 = xla_tuple %v3, %v4
  %6 = xla_tuple %5
  %v7 = vmul.f32 %v3, %v4
  %8 = xla_tuple %v7
  %9 = vst [vmem:[%s2] sm:$0xff] %v7

// kernel: _lambda_.3
$region0: #{_lambda_.3}
  #allocation0 [shape = 'u32[]', space=smem, size = 0x4, offset = 0x4, fixed_abs, tag = 'smem constant byte address 0x4 - core index']
  #allocation1 [shape = 'u32[144,128]{1,0:T(1,128)}', space=vmem, size = 0x12000, scoped, tag = 'internal scratch']
  %s0 = inlined_call_operand.vmem [shape: bf16[256,128], index: 0, kind: input, shape index: {}]
  %s1 = inlined_call_operand.vmem [shape: bf16[128,128], index: 1, kind: input, shape index: {}]
  %s2 = inlined_call_operand.vmem [shape: bf16[256,128], index: 2, kind: output, shape index: {}]
  %s3 = sld [smem:[#allocation0]]
  $region41: #{_lambda_.3} parent=0
    _
  %s5 = ssub.s32 1, %s3
  %s6 = scalar_select 0, %s5, %s3
  loop: start=0, step=1, limit=4
  $region2: #{_lambda_.3} parent=0 // loop_pre_header
    _
  $region3: #{_lambda_.3} parent=0 // loop_header
    %s8 = sphi 0, %s12
    %p9 = scmp.ge.s32.totalorder %s8, 4
    %s18 = sphi 0, %s20
    %s21 = sphi 0, %s18
    %s22 = sphi 0, %s21
    %s38 = sphi 0, %s22
    %s42 = sphi 0, %s42
    %s44 = sphi 0, %s42
    %s45 = sphi 0, %s44
    %s59 = sphi 0, %s45
    %s65 = sphi 0, %s67
    %s68 = sphi 0, %s65
    %s69 = sphi 0, %s68
    %s85 = sphi 0, %s69
  $region4: #{_lambda_.3} parent=0 // loop_header_branch
    %11 = sbr.rel (%p9) target = $region8
  $region5: #{_lambda_.3} parent=0 // loop_body
    %s13 = ssub.s32 %s8, 1
    %s14 = ssub.s32 %s8, 2
    %s15 = sadd.s32 %s8, 1
    %s16 = ssub.s32 %s8, %s15
    %p17 = scmp.eq.s32.totalorder %s16, 0
    %s19 = sadd.s32 %s18, 1
    %s20 = scalar_select %p17, %s18, %s19
    %p23 = pneg %p17
    %p24 = scmp.eq.s32.totalorder %s8, 1
    %p25 = por %p23, %p24
    %p26 = scmp.ne.s32.totalorder %s18, %s21
    %p27 = scmp.eq.s32.totalorder %s8, 0
    %p28 = por %p26, %p27
    %p29 = scmp.ne.s32.totalorder %s18, %s21
    %p30 = scmp.eq.s32.totalorder %s13, 1
    %p31 = por %p29, %p30
    %p32 = scmp.ne.s32.totalorder %s21, %s22
    %p33 = scmp.eq.s32.totalorder %s13, 0
    %p34 = por %p32, %p33
    %p35 = scmp.ne.s32.totalorder %s21, %s22
    %p36 = scmp.eq.s32.totalorder %s14, 1
    %p37 = por %p35, %p36
    %p39 = scmp.ne.s32.totalorder %s22, %s38
    %p40 = scmp.eq.s32.totalorder %s14, 0
    %p41 = por %p39, %p40
    %s43 = sadd.s32 %s42, 1
    %p46 = scmp.eq.s32.totalorder %s8, 1
    %p47 = scmp.ne.s32.totalorder %s42, %s44
    %p48 = scmp.eq.s32.totalorder %s8, 0
    %p49 = por %p47, %p48
    %p50 = scmp.ne.s32.totalorder %s42, %s44
    %p51 = scmp.eq.s32.totalorder %s13, 1
    %p52 = por %p50, %p51
    %p53 = scmp.ne.s32.totalorder %s44, %s45
    %p54 = scmp.eq.s32.totalorder %s13, 0
    %p55 = por %p53, %p54
    %p56 = scmp.ne.s32.totalorder %s44, %s45
    %p57 = scmp.eq.s32.totalorder %s14, 1
    %p58 = por %p56, %p57
    %p60 = scmp.ne.s32.totalorder %s45, %s59
    %p61 = scmp.eq.s32.totalorder %s14, 0
    %p62 = por %p60, %p61
    %s63 = ssub.s32 %s8, %s15
    %p64 = scmp.eq.s32.totalorder %s63, 0
    %s66 = sadd.s32 %s65, 1
    %s67 = scalar_select %p64, %s65, %s66
    %p70 = pneg %p64
    %p71 = scmp.eq.s32.totalorder %s8, 1
    %p72 = por %p70, %p71
    %p73 = scmp.ne.s32.totalorder %s65, %s68
    %p74 = scmp.eq.s32.totalorder %s8, 0
    %p75 = por %p73, %p74
    %p76 = scmp.ne.s32.totalorder %s65, %s68
    %p77 = scmp.eq.s32.totalorder %s13, 1
    %p78 = por %p76, %p77
    %p79 = scmp.ne.s32.totalorder %s68, %s69
    %p80 = scmp.eq.s32.totalorder %s13, 0
    %p81 = por %p79, %p80
    %p82 = scmp.ne.s32.totalorder %s68, %s69
    %p83 = scmp.eq.s32.totalorder %s14, 1
    %p84 = por %p82, %p83
    %p86 = scmp.ne.s32.totalorder %s69, %s85
    %p87 = scmp.eq.s32.totalorder %s14, 0
    %p88 = por %p86, %p87
    %p89 = scmp.le.s32.totalorder 1, %s8
    %p90 = scmp.lt.s32.totalorder %s8, 3
    %p91 = pnand %p89, %p90
    %p92 = pneg %p91
    // Predicated region
    $region9: #{_lambda_.3} parent=5 // pred_check
      _
    $region10: #{_lambda_.3} parent=5 // pred_check_branch
      %94 = sbr.rel (%p91) target = $region12
    $region11: #{_lambda_.3} parent=5 // pred_region
      %s95 = ssub.s32 %s8, 1
      // Predicated region
      $region13: #{_lambda_.3} parent=11 // pred_check
        %p96 = pneg %p55
      $region14: #{_lambda_.3} parent=11 // pred_check_branch
        %98 = sbr.rel (%p96) target = $region16
      $region15: #{_lambda_.3} parent=11 // pred_region
        _
      $region16: #{_lambda_.3} parent=11 // pred_fallthru
        _
    $region12: #{_lambda_.3} parent=5 // pred_fallthru
      _
    %p99 = scmp.lt.s32.totalorder %s8, 2
    // Predicated region
    $region17: #{_lambda_.3} parent=5 // pred_check
      %p100 = pneg %p99
    $region18: #{_lambda_.3} parent=5 // pred_check_branch
      %102 = sbr.rel (%p100) target = $region20
    $region19: #{_lambda_.3} parent=5 // pred_region
      // Predicated region
      $region21: #{_lambda_.3} parent=19 // pred_check
        %p103 = pneg %p28
      $region22: #{_lambda_.3} parent=19 // pred_check_branch
        %105 = sbr.rel (%p103) target = $region24
      $region23: #{_lambda_.3} parent=19 // pred_region
        %s106 = smul.u32 16, %s8
        %p107 = scmp.lt.s32.totalorder %s106, 31
        %s108 = scalar_select %p107, %s106, 31
        %s109 = smul.addr %s108, 4
        %s110 = scalar_lea.vmem %s0, %s109
        %s111 = smul.u32 16, %s8
      $region24: #{_lambda_.3} parent=19 // pred_fallthru
        _
    $region20: #{_lambda_.3} parent=5 // pred_fallthru
      _
    %p112 = scmp.le.s32.totalorder 1, %s8
    %p113 = scmp.lt.s32.totalorder %s8, 3
    %p114 = pnand %p112, %p113
    %p115 = pneg %p114
    // Predicated region
    $region25: #{_lambda_.3} parent=5 // pred_check
      _
    $region26: #{_lambda_.3} parent=5 // pred_check_branch
      %117 = sbr.rel (%p114) target = $region28
    $region27: #{_lambda_.3} parent=5 // pred_region
      %s118 = ssub.s32 %s8, 1
      %s119 = smul.u32 16, %s13
      %p120 = scmp.lt.s32.totalorder %s119, 31
      %s121 = scalar_select %p120, %s119, 31
      %s122 = smul.addr %s121, 4
      %s123 = scalar_lea.vmem %s0, %s122
      %p124 = pneg %p34
      %p125 = pneg %p31
      %p126 = pneg %p55
      %p127 = pneg %p52
      %p128 = pneg %p81
      %p129 = pneg %p78
      %s130 = smul.u32 16, %s13
      %p131 = scmp.lt.s32.totalorder %s130, 31
      %s132 = scalar_select %p131, %s130, 31
      %s133 = smul.addr %s132, 4
      %s134 = scalar_lea.vmem %s2, %s133
      %s135 = smul.u32 16, %s13
      %p136 = scmp.lt.s32.totalorder %s135, 31
      %s137 = scalar_select %p136, %s135, 31
      %s138 = smul.addr %s137, 4
      %s139 = scalar_lea.vmem %s0, %s138
      %s140 = smul.u32 16, %s13
      %s141 = smul.u32 16, %s13
      %p142 = scmp.lt.s32.totalorder %s141, 31
      %s143 = scalar_select %p142, %s141, 31
      %s144 = smul.addr %s143, 4
      %s145 = scalar_lea.vmem %s2, %s144
      %s146 = smul.u32 16, %s13
      %v148 = vld [vmem:[%s139] sm:$0xf]
      %v149 = vld [vmem:[%s139 + $0x4] sm:$0xf]
      %v150 = vld [vmem:[%s139 + $0x8] sm:$0xf]
      %v151 = vld [vmem:[%s139 + $0xc] sm:$0xf]
      %v152 = vld [vmem:[%s139 + $0x10] sm:$0xf]
      %v153 = vld [vmem:[%s139 + $0x14] sm:$0xf]
      %v154 = vld [vmem:[%s139 + $0x18] sm:$0xf]
      %v155 = vld [vmem:[%s139 + $0x1c] sm:$0xf]
      %v156 = vld [vmem:[%s139 + $0x20] sm:$0xf]
      %v157 = vld [vmem:[%s139 + $0x24] sm:$0xf]
      %v158 = vld [vmem:[%s139 + $0x28] sm:$0xf]
      %v159 = vld [vmem:[%s139 + $0x2c] sm:$0xf]
      %v160 = vld [vmem:[%s139 + $0x30] sm:$0xf]
      %v161 = vld [vmem:[%s139 + $0x34] sm:$0xf]
      %v162 = vld [vmem:[%s139 + $0x38] sm:$0xf]
      %v163 = vld [vmem:[%s139 + $0x3c] sm:$0xf]
      %v164 = vld [vmem:[%s1] sm:$0xf]
      %v165 = vld [vmem:[%s1 + $0x4] sm:$0xf]
      %v166 = vld [vmem:[%s1 + $0x8] sm:$0xf]
      %v167 = vld [vmem:[%s1 + $0xc] sm:$0xf]
      %v168 = vld [vmem:[%s1 + $0x10] sm:$0xf]
      %v169 = vld [vmem:[%s1 + $0x14] sm:$0xf]
      %v170 = vld [vmem:[%s1 + $0x18] sm:$0xf]
      %v171 = vld [vmem:[%s1 + $0x1c] sm:$0xf]
      %v172 = vld [vmem:[%s1 + $0x20] sm:$0xf]
      %v173 = vld [vmem:[%s1 + $0x24] sm:$0xf]
      %v174 = vld [vmem:[%s1 + $0x28] sm:$0xf]
      %v175 = vld [vmem:[%s1 + $0x2c] sm:$0xf]
      %v176 = vld [vmem:[%s1 + $0x30] sm:$0xf]
      %v177 = vld [vmem:[%s1 + $0x34] sm:$0xf]
      %v178 = vld [vmem:[%s1 + $0x38] sm:$0xf]
      %v179 = vld [vmem:[%s1 + $0x3c] sm:$0xf]
      %v196 = vunpack.c.l.b16 %v148
      %v197 = vunpack.c.l.b16 %v149
      %v198 = vunpack.c.l.b16 %v150
      %v199 = vunpack.c.l.b16 %v151
      %v200 = vunpack.c.l.b16 %v152
      %v201 = vunpack.c.l.b16 %v153
      %v202 = vunpack.c.l.b16 %v154
      %v203 = vunpack.c.l.b16 %v155
      %v204 = vunpack.c.l.b16 %v156
      %v205 = vunpack.c.l.b16 %v157
      %v206 = vunpack.c.l.b16 %v158
      %v207 = vunpack.c.l.b16 %v159
      %v208 = vunpack.c.l.b16 %v160
      %v209 = vunpack.c.l.b16 %v161
      %v210 = vunpack.c.l.b16 %v162
      %v211 = vunpack.c.l.b16 %v163
      %v212 = vpack.c.b16 %v197, %v196
      %v213 = vpack.c.b16 %v199, %v198
      %v214 = vpack.c.b16 %v201, %v200
      %v215 = vpack.c.b16 %v203, %v202
      %v216 = vpack.c.b16 %v205, %v204
      %v217 = vpack.c.b16 %v207, %v206
      %v218 = vpack.c.b16 %v209, %v208
      %v219 = vpack.c.b16 %v211, %v210
      %v244 = vunpack.c.l.b16 %v164
      %v245 = vunpack.c.l.b16 %v165
      %v246 = vunpack.c.l.b16 %v166
      %v247 = vunpack.c.l.b16 %v167
      %v248 = vunpack.c.l.b16 %v168
      %v249 = vunpack.c.l.b16 %v169
      %v250 = vunpack.c.l.b16 %v170
      %v251 = vunpack.c.l.b16 %v171
      %v252 = vunpack.c.l.b16 %v172
      %v253 = vunpack.c.l.b16 %v173
      %v254 = vunpack.c.l.b16 %v174
      %v255 = vunpack.c.l.b16 %v175
      %v256 = vunpack.c.l.b16 %v176
      %v257 = vunpack.c.l.b16 %v177
      %v258 = vunpack.c.l.b16 %v178
      %v259 = vunpack.c.l.b16 %v179
      %v260 = vpack.c.b16 %v245, %v244
      %v261 = vpack.c.b16 %v247, %v246
      %v262 = vpack.c.b16 %v249, %v248
      %v263 = vpack.c.b16 %v251, %v250
      %v264 = vpack.c.b16 %v253, %v252
      %v265 = vpack.c.b16 %v255, %v254
      %v266 = vpack.c.b16 %v257, %v256
      %v267 = vpack.c.b16 %v259, %v258
      %276 = vmatprep.subr.bf16.mxu0 0
      %277 = vmatpush1.bf16.msra.mxu0 %v260
      %278 = vmatprep.subr.bf16.mxu0 0
      %279 = vmatpush1.bf16.msra.mxu0 %v261
      %280 = vmatprep.subr.bf16.mxu0 0
      %281 = vmatpush1.bf16.msra.mxu0 %v262
      %282 = vmatprep.subr.bf16.mxu0 0
      %283 = vmatpush1.bf16.msra.mxu0 %v263
      %284 = vmatprep.subr.bf16.mxu0 0
      %285 = vmatpush1.bf16.msra.mxu0 %v264
      %286 = vmatprep.subr.bf16.mxu0 0
      %287 = vmatpush1.bf16.msra.mxu0 %v265
      %288 = vmatprep.subr.bf16.mxu0 0
      %289 = vmatpush1.bf16.msra.mxu0 %v266
      %290 = vmatprep.subr.bf16.mxu0 0
      %291 = vmatpush1.bf16.msra.mxu0 %v267
      %292 = vmatprep.subr.bf16.mxu0 0
      %293 = vmatpush1.bf16.msra.mxu0 0
      %294 = vmatprep.subr.bf16.mxu0 0
      %295 = vmatpush1.bf16.msra.mxu0 0
      %296 = vmatprep.subr.bf16.mxu0 0
      %297 = vmatpush1.bf16.msra.mxu0 0
      %298 = vmatprep.subr.bf16.mxu0 0
      %299 = vmatpush1.bf16.msra.mxu0 0
      %300 = vmatprep.subr.bf16.mxu0 0
      %301 = vmatpush1.bf16.msra.mxu0 0
      %302 = vmatprep.subr.bf16.mxu0 0
      %303 = vmatpush1.bf16.msra.mxu0 0
      %304 = vmatprep.subr.bf16.mxu0 0
      %305 = vmatpush1.bf16.msra.mxu0 0
      %306 = vmatprep.subr.bf16.mxu0 0
      %307 = vmatpush1.bf16.msra.mxu0 0
      %308 = vmatprep.mubr.bf16.mxu0 0
      %309 = vmatmul.mubr.bf16.gmra.mrb[0].mxu0 %v212
      %v310 = vpop.f32.mrb[0].mxu0
      %v311 = vadd.f32 0.0, %v310
      %v312 = vpop.f32.mrb[0].mxu0
      %v313 = vpop.f32.mrb[0].mxu0
      %v314 = vadd.f32 0.0, %v313
      %v315 = vpop.f32.mrb[0].mxu0
      %316 = vmatprep.mubr.bf16.mxu0 0
      %317 = vmatmul.mubr.bf16.gmra.mrb[0].mxu0 %v213
      %v318 = vpop.f32.mrb[0].mxu0
      %v319 = vadd.f32 0.0, %v318
      %v320 = vpop.f32.mrb[0].mxu0
      %v321 = vpop.f32.mrb[0].mxu0
      %v322 = vadd.f32 0.0, %v321
      %v323 = vpop.f32.mrb[0].mxu0
      %324 = vmatprep.mubr.bf16.mxu0 0
      %325 = vmatmul.mubr.bf16.gmra.mrb[0].mxu0 %v214
      %v326 = vpop.f32.mrb[0].mxu0
      %v327 = vadd.f32 0.0, %v326
      %v328 = vpop.f32.mrb[0].mxu0
      %v329 = vpop.f32.mrb[0].mxu0
      %v330 = vadd.f32 0.0, %v329
      %v331 = vpop.f32.mrb[0].mxu0
      %332 = vmatprep.mubr.bf16.mxu0 0
      %333 = vmatmul.mubr.bf16.gmra.mrb[0].mxu0 %v215
      %v334 = vpop.f32.mrb[0].mxu0
      %v335 = vadd.f32 0.0, %v334
      %v336 = vpop.f32.mrb[0].mxu0
      %v337 = vpop.f32.mrb[0].mxu0
      %v338 = vadd.f32 0.0, %v337
      %v339 = vpop.f32.mrb[0].mxu0
      %340 = vmatprep.mubr.bf16.mxu0 0
      %341 = vmatmul.mubr.bf16.gmra.mrb[0].mxu0 %v216
      %v342 = vpop.f32.mrb[0].mxu0
      %v343 = vadd.f32 0.0, %v342
      %v344 = vpop.f32.mrb[0].mxu0
      %v345 = vpop.f32.mrb[0].mxu0
      %v346 = vadd.f32 0.0, %v345
      %v347 = vpop.f32.mrb[0].mxu0
      %348 = vmatprep.mubr.bf16.mxu0 0
      %349 = vmatmul.mubr.bf16.gmra.mrb[0].mxu0 %v217
      %v350 = vpop.f32.mrb[0].mxu0
      %v351 = vadd.f32 0.0, %v350
      %v352 = vpop.f32.mrb[0].mxu0
      %v353 = vpop.f32.mrb[0].mxu0
      %v354 = vadd.f32 0.0, %v353
      %v355 = vpop.f32.mrb[0].mxu0
      %356 = vmatprep.mubr.bf16.mxu0 0
      %357 = vmatmul.mubr.bf16.gmra.mrb[0].mxu0 %v218
      %v358 = vpop.f32.mrb[0].mxu0
      %v359 = vadd.f32 0.0, %v358
      %v360 = vpop.f32.mrb[0].mxu0
      %v361 = vpop.f32.mrb[0].mxu0
      %v362 = vadd.f32 0.0, %v361
      %v363 = vpop.f32.mrb[0].mxu0
      %364 = vmatprep.mubr.bf16.mxu0 0
      %365 = vmatmul.mubr.bf16.gmra.mrb[0].mxu0 %v219
      %v366 = vpop.f32.mrb[0].mxu0
      %v367 = vadd.f32 0.0, %v366
      %v368 = vpop.f32.mrb[0].mxu0
      %v369 = vpop.f32.mrb[0].mxu0
      %v370 = vadd.f32 0.0, %v369
      %v371 = vpop.f32.mrb[0].mxu0
      %372 = vdwg.mxu0
      %v373 = vpack.c.bf16 %v314, %v311
      %v374 = vpack.c.bf16 %v322, %v319
      %v375 = vpack.c.bf16 %v330, %v327
      %v376 = vpack.c.bf16 %v338, %v335
      %v377 = vpack.c.bf16 %v346, %v343
      %v378 = vpack.c.bf16 %v354, %v351
      %v379 = vpack.c.bf16 %v362, %v359
      %v380 = vpack.c.bf16 %v370, %v367
      %v389 = vunpack.c.l.b16 %v373
      %v390 = vunpack.c.h.b16 %v373
      %v391 = vunpack.c.l.b16 %v374
      %v392 = vunpack.c.h.b16 %v374
      %v393 = vunpack.c.l.b16 %v375
      %v394 = vunpack.c.h.b16 %v375
      %v395 = vunpack.c.l.b16 %v376
      %v396 = vunpack.c.h.b16 %v376
      %v397 = vunpack.c.l.b16 %v377
      %v398 = vunpack.c.h.b16 %v377
      %v399 = vunpack.c.l.b16 %v378
      %v400 = vunpack.c.h.b16 %v378
      %v401 = vunpack.c.l.b16 %v379
      %v402 = vunpack.c.h.b16 %v379
      %v403 = vunpack.c.l.b16 %v380
      %v404 = vunpack.c.h.b16 %v380
      %v405 = vpack.c.b16 %v389, %v389
      %v406 = vpack.c.b16 %v390, %v390
      %v407 = vpack.c.b16 %v391, %v391
      %v408 = vpack.c.b16 %v392, %v392
      %v409 = vpack.c.b16 %v393, %v393
      %v410 = vpack.c.b16 %v394, %v394
      %v411 = vpack.c.b16 %v395, %v395
      %v412 = vpack.c.b16 %v396, %v396
      %v413 = vpack.c.b16 %v397, %v397
      %v414 = vpack.c.b16 %v398, %v398
      %v415 = vpack.c.b16 %v399, %v399
      %v416 = vpack.c.b16 %v400, %v400
      %v417 = vpack.c.b16 %v401, %v401
      %v418 = vpack.c.b16 %v402, %v402
      %v419 = vpack.c.b16 %v403, %v403
      %v420 = vpack.c.b16 %v404, %v404
      %437 = vst [vmem:[%s145] sm:$0xf] %v405
      %438 = vst [vmem:[%s145 + $0x4] sm:$0xf] %v406
      %439 = vst [vmem:[%s145 + $0x8] sm:$0xf] %v407
      %440 = vst [vmem:[%s145 + $0xc] sm:$0xf] %v408
      %441 = vst [vmem:[%s145 + $0x10] sm:$0xf] %v409
      %442 = vst [vmem:[%s145 + $0x14] sm:$0xf] %v410
      %443 = vst [vmem:[%s145 + $0x18] sm:$0xf] %v411
      %444 = vst [vmem:[%s145 + $0x1c] sm:$0xf] %v412
      %445 = vst [vmem:[%s145 + $0x20] sm:$0xf] %v413
      %446 = vst [vmem:[%s145 + $0x24] sm:$0xf] %v414
      %447 = vst [vmem:[%s145 + $0x28] sm:$0xf] %v415
      %448 = vst [vmem:[%s145 + $0x2c] sm:$0xf] %v416
      %449 = vst [vmem:[%s145 + $0x30] sm:$0xf] %v417
      %450 = vst [vmem:[%s145 + $0x34] sm:$0xf] %v418
      %451 = vst [vmem:[%s145 + $0x38] sm:$0xf] %v419
      %452 = vst [vmem:[%s145 + $0x3c] sm:$0xf] %v420
      %s453 = smul.u32 16, %s13
      %p454 = scmp.lt.s32.totalorder %s453, 31
      %s455 = scalar_select %p454, %s453, 31
      %s456 = smul.addr %s455, 4
      %s457 = scalar_lea.vmem %s2, %s456
      // Predicated region
      $region29: #{_lambda_.3} parent=27 // pred_check
        %p458 = pneg %p78
      $region30: #{_lambda_.3} parent=27 // pred_check_branch
        %460 = sbr.rel (%p458) target = $region32
      $region31: #{_lambda_.3} parent=27 // pred_region
        %s461 = smul.u32 16, %s13
      $region32: #{_lambda_.3} parent=27 // pred_fallthru
        _
    $region28: #{_lambda_.3} parent=5 // pred_fallthru
      _
    %p462 = scmp.le.s32.totalorder 2, %s8
    // Predicated region
    $region33: #{_lambda_.3} parent=5 // pred_check
      %p463 = pneg %p462
    $region34: #{_lambda_.3} parent=5 // pred_check_branch
      %465 = sbr.rel (%p463) target = $region36
    $region35: #{_lambda_.3} parent=5 // pred_region
      %s466 = ssub.s32 %s8, 2
      // Predicated region
      $region37: #{_lambda_.3} parent=35 // pred_check
        %p467 = pneg %p84
      $region38: #{_lambda_.3} parent=35 // pred_check_branch
        %469 = sbr.rel (%p467) target = $region40
      $region39: #{_lambda_.3} parent=35 // pred_region
        %s470 = smul.u32 16, %s14
        %p471 = scmp.lt.s32.totalorder %s470, 31
        %s472 = scalar_select %p471, %s470, 31
        %s473 = smul.addr %s472, 4
        %s474 = scalar_lea.vmem %s2, %s473
      $region40: #{_lambda_.3} parent=35 // pred_fallthru
        _
    $region36: #{_lambda_.3} parent=5 // pred_fallthru
      _
  $region6: #{_lambda_.3} parent=0 // loop_footer
    %s12 = sadd.s32 1, %s8
  $region7: #{_lambda_.3} parent=0 // loop_footer_branch
    %7 = sbr.rel target = $region3
  $region8: #{_lambda_.3} parent=0 // loop_exit
    _

// kernel: _lambda_.4
$region0: #{_lambda_.4}
  #allocation0 [shape = 'u32[]', space=smem, size = 0x4, offset = 0x4, fixed_abs, tag = 'smem constant byte address 0x4 - core index']
  #allocation1 [shape = 'u32[144,128]{1,0:T(1,128)}', space=vmem, size = 0x12000, scoped, tag = 'internal scratch']
  #allocation2 [shape = 'f32[128,128]{1,0:T(8,128)}', space=vmem, size = 0x10000, scoped, tag = 'scratch operand']
  %s0 = inlined_call_operand.vmem [shape: bf16[256,256], index: 0, kind: input, shape index: {}]
  %s1 = inlined_call_operand.vmem [shape: bf16[256,128], index: 1, kind: input, shape index: {}]
  %s2 = inlined_call_operand.vmem [shape: f32[1,128], index: 2, kind: input, shape index: {}]
  %s3 = inlined_call_operand.vmem [shape: bf16[128,128], index: 3, kind: input, shape index: {}]
  %s4 = inlined_call_operand.vmem [shape: bf16[256,128], index: 4, kind: output, shape index: {}]
  %s5 = sld [smem:[#allocation0]]
  $region57: #{_lambda_.4} parent=0
    _
  %s7 = ssub.s32 1, %s5
  %s8 = scalar_select 0, %s7, %s5
  loop: start=0, step=1, limit=4
  $region2: #{_lambda_.4} parent=0 // loop_pre_header
    _
  $region3: #{_lambda_.4} parent=0 // loop_header
    %s10 = sphi 0, %s14
    %p11 = scmp.ge.s32.totalorder %s10, 4
    %s17 = sphi 0, %s29
    %s18 = sphi 0, %s25
    %s19 = sphi 0, %s17
    %s20 = sphi 0, %s18
    %s21 = sphi 0, %s19
    %s22 = sphi 0, %s20
    %s34 = sphi 0, %s36
    %s37 = sphi 0, %s34
    %s38 = sphi 0, %s37
    %s54 = sphi 0, %s38
    %s60 = sphi 0, %s62
    %s63 = sphi 0, %s60
    %s64 = sphi 0, %s63
    %s80 = sphi 0, %s64
    %s84 = sphi 0, %s84
    %s86 = sphi 0, %s84
    %s87 = sphi 0, %s86
    %s101 = sphi 0, %s87
    %s105 = sphi 0, %s105
    %s107 = sphi 0, %s105
    %s108 = sphi 0, %s107
    %s122 = sphi 0, %s108
    %s128 = sphi 0, %s130
    %s131 = sphi 0, %s128
    %s132 = sphi 0, %s131
    %s148 = sphi 0, %s132
  $region4: #{_lambda_.4} parent=0 // loop_header_branch
    %13 = sbr.rel (%p11) target = $region8
  $region5: #{_lambda_.4} parent=0 // loop_body
    %s15 = ssub.s32 %s10, 1
    %s16 = ssub.s32 %s10, 2
    %s23 = sadd.s32 1, %s18
    %p24 = scmp.ge.s32.totalorder %s23, 1
    %s25 = scalar_select %p24, 0, %s23
    %s26 = sadd.s32 1, %s17
    %s27 = scalar_select %p24, %s26, %s17
    %p28 = scmp.ge.s32.totalorder %s27, 2
    %s29 = scalar_select %p28, 0, %s27
    %s30 = ssub.s32 %s17, %s29
    %s31 = ssub.s32 %s18, %s25
    %s32 = sor.u32 %s30, %s31
    %p33 = scmp.eq.s32.totalorder %s32, 0
    %s35 = sadd.s32 %s34, 1
    %s36 = scalar_select %p33, %s34, %s35
    %p39 = pneg %p33
    %p40 = scmp.eq.s32.totalorder %s10, 1
    %p41 = por %p39, %p40
    %p42 = scmp.ne.s32.totalorder %s34, %s37
    %p43 = scmp.eq.s32.totalorder %s10, 0
    %p44 = por %p42, %p43
    %p45 = scmp.ne.s32.totalorder %s34, %s37
    %p46 = scmp.eq.s32.totalorder %s15, 1
    %p47 = por %p45, %p46
    %p48 = scmp.ne.s32.totalorder %s37, %s38
    %p49 = scmp.eq.s32.totalorder %s15, 0
    %p50 = por %p48, %p49
    %p51 = scmp.ne.s32.totalorder %s37, %s38
    %p52 = scmp.eq.s32.totalorder %s16, 1
    %p53 = por %p51, %p52
    %p55 = scmp.ne.s32.totalorder %s38, %s54
    %p56 = scmp.eq.s32.totalorder %s16, 0
    %p57 = por %p55, %p56
    %s58 = ssub.s32 %s18, %s25
    %p59 = scmp.eq.s32.totalorder %s58, 0
    %s61 = sadd.s32 %s60, 1
    %s62 = scalar_select %p59, %s60, %s61
    %p65 = pneg %p59
    %p66 = scmp.eq.s32.totalorder %s10, 1
    %p67 = por %p65, %p66
    %p68 = scmp.ne.s32.totalorder %s60, %s63
    %p69 = scmp.eq.s32.totalorder %s10, 0
    %p70 = por %p68, %p69
    %p71 = scmp.ne.s32.totalorder %s60, %s63
    %p72 = scmp.eq.s32.totalorder %s15, 1
    %p73 = por %p71, %p72
    %p74 = scmp.ne.s32.totalorder %s63, %s64
    %p75 = scmp.eq.s32.totalorder %s15, 0
    %p76 = por %p74, %p75
    %p77 = scmp.ne.s32.totalorder %s63, %s64
    %p78 = scmp.eq.s32.totalorder %s16, 1
    %p79 = por %p77, %p78
    %p81 = scmp.ne.s32.totalorder %s64, %s80
    %p82 = scmp.eq.s32.totalorder %s16, 0
    %p83 = por %p81, %p82
    %s85 = sadd.s32 %s84, 1
    %p88 = scmp.eq.s32.totalorder %s10, 1
    %p89 = scmp.ne.s32.totalorder %s84, %s86
    %p90 = scmp.eq.s32.totalorder %s10, 0
    %p91 = por %p89, %p90
    %p92 = scmp.ne.s32.totalorder %s84, %s86
    %p93 = scmp.eq.s32.totalorder %s15, 1
    %p94 = por %p92, %p93
    %p95 = scmp.ne.s32.totalorder %s86, %s87
    %p96 = scmp.eq.s32.totalorder %s15, 0
    %p97 = por %p95, %p96
    %p98 = scmp.ne.s32.totalorder %s86, %s87
    %p99 = scmp.eq.s32.totalorder %s16, 1
    %p100 = por %p98, %p99
    %p102 = scmp.ne.s32.totalorder %s87, %s101
    %p103 = scmp.eq.s32.totalorder %s16, 0
    %p104 = por %p102, %p103
    %s106 = sadd.s32 %s105, 1
    %p109 = scmp.eq.s32.totalorder %s10, 1
    %p110 = scmp.ne.s32.totalorder %s105, %s107
    %p111 = scmp.eq.s32.totalorder %s10, 0
    %p112 = por %p110, %p111
    %p113 = scmp.ne.s32.totalorder %s105, %s107
    %p114 = scmp.eq.s32.totalorder %s15, 1
    %p115 = por %p113, %p114
    %p116 = scmp.ne.s32.totalorder %s107, %s108
    %p117 = scmp.eq.s32.totalorder %s15, 0
    %p118 = por %p116, %p117
    %p119 = scmp.ne.s32.totalorder %s107, %s108
    %p120 = scmp.eq.s32.totalorder %s16, 1
    %p121 = por %p119, %p120
    %p123 = scmp.ne.s32.totalorder %s108, %s122
    %p124 = scmp.eq.s32.totalorder %s16, 0
    %p125 = por %p123, %p124
    %s126 = ssub.s32 %s17, %s29
    %p127 = scmp.eq.s32.totalorder %s126, 0
    %s129 = sadd.s32 %s128, 1
    %s130 = scalar_select %p127, %s128, %s129
    %p133 = pneg %p127
    %p134 = scmp.eq.s32.totalorder %s10, 1
    %p135 = por %p133, %p134
    %p136 = scmp.ne.s32.totalorder %s128, %s131
    %p137 = scmp.eq.s32.totalorder %s10, 0
    %p138 = por %p136, %p137
    %p139 = scmp.ne.s32.totalorder %s128, %s131
    %p140 = scmp.eq.s32.totalorder %s15, 1
    %p141 = por %p139, %p140
    %p142 = scmp.ne.s32.totalorder %s131, %s132
    %p143 = scmp.eq.s32.totalorder %s15, 0
    %p144 = por %p142, %p143
    %p145 = scmp.ne.s32.totalorder %s131, %s132
    %p146 = scmp.eq.s32.totalorder %s16, 1
    %p147 = por %p145, %p146
    %p149 = scmp.ne.s32.totalorder %s132, %s148
    %p150 = scmp.eq.s32.totalorder %s16, 0
    %p151 = por %p149, %p150
    %p152 = scmp.le.s32.totalorder 1, %s10
    %p153 = scmp.lt.s32.totalorder %s10, 3
    %p154 = pnand %p152, %p153
    %p155 = pneg %p154
    // Predicated region
    $region9: #{_lambda_.4} parent=5 // pred_check
      _
    $region10: #{_lambda_.4} parent=5 // pred_check_branch
      %157 = sbr.rel (%p154) target = $region12
    $region11: #{_lambda_.4} parent=5 // pred_region
      %s158 = ssub.s32 %s10, 1
      // Predicated region
      $region13: #{_lambda_.4} parent=11 // pred_check
        %p159 = pneg %p76
      $region14: #{_lambda_.4} parent=11 // pred_check_branch
        %161 = sbr.rel (%p159) target = $region16
      $region15: #{_lambda_.4} parent=11 // pred_region
        %s162 = smul.u32 32, %s20
        %p163 = scmp.lt.s32.totalorder %s162, 31
        %s164 = scalar_select %p163, %s162, 31
        %s165 = smul.addr %s164, 4
        %s166 = scalar_lea.vmem %s1, %s165
        %s167 = smul.u32 32, %s20
      $region16: #{_lambda_.4} parent=11 // pred_fallthru
        _
      // Predicated region
      $region17: #{_lambda_.4} parent=11 // pred_check
        %p168 = pneg %p97
      $region18: #{_lambda_.4} parent=11 // pred_check_branch
        %170 = sbr.rel (%p168) target = $region20
      $region19: #{_lambda_.4} parent=11 // pred_region
        _
      $region20: #{_lambda_.4} parent=11 // pred_fallthru
        _
      // Predicated region
      $region21: #{_lambda_.4} parent=11 // pred_check
        %p171 = pneg %p118
      $region22: #{_lambda_.4} parent=11 // pred_check_branch
        %173 = sbr.rel (%p171) target = $region24
      $region23: #{_lambda_.4} parent=11 // pred_region
        _
      $region24: #{_lambda_.4} parent=11 // pred_fallthru
        _
    $region12: #{_lambda_.4} parent=5 // pred_fallthru
      _
    %p174 = scmp.lt.s32.totalorder %s10, 2
    // Predicated region
    $region25: #{_lambda_.4} parent=5 // pred_check
      %p175 = pneg %p174
    $region26: #{_lambda_.4} parent=5 // pred_check_branch
      %177 = sbr.rel (%p175) target = $region28
    $region27: #{_lambda_.4} parent=5 // pred_region
      // Predicated region
      $region29: #{_lambda_.4} parent=27 // pred_check
        %p178 = pneg %p44
      $region30: #{_lambda_.4} parent=27 // pred_check_branch
        %180 = sbr.rel (%p178) target = $region32
      $region31: #{_lambda_.4} parent=27 // pred_region
        %s181 = smul.u32 16, %s17
        %s182 = smul.u32 2, %s18
        %p183 = scmp.lt.s32.totalorder %s181, 31
        %s184 = scalar_select %p183, %s181, 31
        %p185 = scmp.lt.s32.totalorder %s182, 1
        %s186 = scalar_select %p185, %s182, 1
        %s187 = smul.addr %s184, 2
        %s188 = sadd.s32 %s186, %s187
        %s189 = smul.addr %s188, 4
        %s190 = scalar_lea.vmem %s0, %s189
        %s191 = smul.u32 16, %s17
        %s192 = smul.u32 2, %s18
      $region32: #{_lambda_.4} parent=27 // pred_fallthru
        _
    $region28: #{_lambda_.4} parent=5 // pred_fallthru
      _
    %p193 = scmp.le.s32.totalorder 1, %s10
    %p194 = scmp.lt.s32.totalorder %s10, 3
    %p195 = pnand %p193, %p194
    %p196 = pneg %p195
    // Predicated region
    $region33: #{_lambda_.4} parent=5 // pred_check
      _
    $region34: #{_lambda_.4} parent=5 // pred_check_branch
      %198 = sbr.rel (%p195) target = $region36
    $region35: #{_lambda_.4} parent=5 // pred_region
      %s199 = ssub.s32 %s10, 1
      %s200 = smul.u32 16, %s19
      %s201 = smul.u32 2, %s20
      %p202 = scmp.lt.s32.totalorder %s200, 31
      %s203 = scalar_select %p202, %s200, 31
      %p204 = scmp.lt.s32.totalorder %s201, 1
      %s205 = scalar_select %p204, %s201, 1
      %s206 = smul.addr %s203, 2
      %s207 = sadd.s32 %s205, %s206
      %s208 = smul.addr %s207, 4
      %s209 = scalar_lea.vmem %s0, %s208
      %p210 = pneg %p50
      %p211 = pneg %p47
      %s212 = smul.u32 32, %s20
      %p213 = scmp.lt.s32.totalorder %s212, 31
      %s214 = scalar_select %p213, %s212, 31
      %s215 = smul.addr %s214, 4
      %s216 = scalar_lea.vmem %s1, %s215
      %p217 = pneg %p76
      %p218 = pneg %p73
      %p219 = pneg %p97
      %p220 = pneg %p94
      %p221 = pneg %p118
      %p222 = pneg %p115
      %p223 = pneg %p144
      %p224 = pneg %p141
      %s225 = smul.u32 16, %s19
      %p226 = scmp.lt.s32.totalorder %s225, 31
      %s227 = scalar_select %p226, %s225, 31
      %s228 = smul.addr %s227, 4
      %s229 = scalar_lea.vmem %s4, %s228
      %s230 = smul.u32 16, %s19
      %s231 = smul.u32 2, %s20
      %p232 = scmp.lt.s32.totalorder %s230, 31
      %s233 = scalar_select %p232, %s230, 31
      %p234 = scmp.lt.s32.totalorder %s231, 1
      %s235 = scalar_select %p234, %s231, 1
      %s236 = smul.addr %s233, 2
      %s237 = sadd.s32 %s235, %s236
      %s238 = smul.addr %s237, 4
      %s239 = scalar_lea.vmem %s0, %s238
      %s240 = smul.u32 16, %s19
      %s241 = smul.u32 2, %s20
      %s242 = smul.u32 32, %s20
      %p243 = scmp.lt.s32.totalorder %s242, 31
      %s244 = scalar_select %p243, %s242, 31
      %s245 = smul.addr %s244, 4
      %s246 = scalar_lea.vmem %s1, %s245
      %s247 = smul.u32 32, %s20
      %s248 = smul.u32 16, %s19
      %p249 = scmp.lt.s32.totalorder %s248, 31
      %s250 = scalar_select %p249, %s248, 31
      %s251 = smul.addr %s250, 4
      %s252 = scalar_lea.vmem %s4, %s251
      %s253 = smul.u32 16, %s19
      %p255 = scmp.eq.s32.totalorder %s20, 0
      // Predicated region
      $region37: #{_lambda_.4} parent=35 // pred_check
        %p256 = pneg %p255
      $region38: #{_lambda_.4} parent=35 // pred_check_branch
        %258 = sbr.rel (%p256) target = $region40
      $region39: #{_lambda_.4} parent=35 // pred_region
        %259 = vst [vmem:[#allocation2] sm:$0xff] 0.0
        %260 = vst [vmem:[#allocation2 + $0x8] sm:$0xff] 0.0
        %261 = vst [vmem:[#allocation2 + $0x10] sm:$0xff] 0.0
        %262 = vst [vmem:[#allocation2 + $0x18] sm:$0xff] 0.0
        %263 = vst [vmem:[#allocation2 + $0x20] sm:$0xff] 0.0
        %264 = vst [vmem:[#allocation2 + $0x28] sm:$0xff] 0.0
        %265 = vst [vmem:[#allocation2 + $0x30] sm:$0xff] 0.0
        %266 = vst [vmem:[#allocation2 + $0x38] sm:$0xff] 0.0
        %267 = vst [vmem:[#allocation2 + $0x40] sm:$0xff] 0.0
        %268 = vst [vmem:[#allocation2 + $0x48] sm:$0xff] 0.0
        %269 = vst [vmem:[#allocation2 + $0x50] sm:$0xff] 0.0
        %270 = vst [vmem:[#allocation2 + $0x58] sm:$0xff] 0.0
        %271 = vst [vmem:[#allocation2 + $0x60] sm:$0xff] 0.0
        %272 = vst [vmem:[#allocation2 + $0x68] sm:$0xff] 0.0
        %273 = vst [vmem:[#allocation2 + $0x70] sm:$0xff] 0.0
        %274 = vst [vmem:[#allocation2 + $0x78] sm:$0xff] 0.0
      $region40: #{_lambda_.4} parent=35 // pred_fallthru
        _
      %v275 = vld [vmem:[#allocation2] sm:$0xff]
      %v276 = vld [vmem:[#allocation2 + $0x8] sm:$0xff]
      %v277 = vld [vmem:[#allocation2 + $0x10] sm:$0xff]
      %v278 = vld [vmem:[#allocation2 + $0x18] sm:$0xff]
      %v279 = vld [vmem:[#allocation2 + $0x20] sm:$0xff]
      %v280 = vld [vmem:[#allocation2 + $0x28] sm:$0xff]
      %v281 = vld [vmem:[#allocation2 + $0x30] sm:$0xff]
      %v282 = vld [vmem:[#allocation2 + $0x38] sm:$0xff]
      %v283 = vld [vmem:[#allocation2 + $0x40] sm:$0xff]
      %v284 = vld [vmem:[#allocation2 + $0x48] sm:$0xff]
      %v285 = vld [vmem:[#allocation2 + $0x50] sm:$0xff]
      %v286 = vld [vmem:[#allocation2 + $0x58] sm:$0xff]
      %v287 = vld [vmem:[#allocation2 + $0x60] sm:$0xff]
      %v288 = vld [vmem:[#allocation2 + $0x68] sm:$0xff]
      %v289 = vld [vmem:[#allocation2 + $0x70] sm:$0xff]
      %v290 = vld [vmem:[#allocation2 + $0x78] sm:$0xff]
      %v291 = vld [vmem:[%s239] sm:$0xff]
      %v292 = vld [vmem:[%s239 + $0x8] sm:$0xff]
      %v293 = vld [vmem:[%s239 + $0x10] sm:$0xff]
      %v294 = vld [vmem:[%s239 + $0x18] sm:$0xff]
      %v295 = vld [vmem:[%s239 + $0x20] sm:$0xff]
      %v296 = vld [vmem:[%s239 + $0x28] sm:$0xff]
      %v297 = vld [vmem:[%s239 + $0x30] sm:$0xff]
      %v298 = vld [vmem:[%s239 + $0x38] sm:$0xff]
      %v299 = vld [vmem:[%s239 + $0x40] sm:$0xff]
      %v300 = vld [vmem:[%s239 + $0x48] sm:$0xff]
      %v301 = vld [vmem:[%s239 + $0x50] sm:$0xff]
      %v302 = vld [vmem:[%s239 + $0x58] sm:$0xff]
      %v303 = vld [vmem:[%s239 + $0x60] sm:$0xff]
      %v304 = vld [vmem:[%s239 + $0x68] sm:$0xff]
      %v305 = vld [vmem:[%s239 + $0x70] sm:$0xff]
      %v306 = vld [vmem:[%s239 + $0x78] sm:$0xff]
      %v307 = vld [vmem:[%s246] sm:$0xf]
      %v308 = vld [vmem:[%s246 + $0x4] sm:$0xf]
      %v309 = vld [vmem:[%s246 + $0x8] sm:$0xf]
      %v310 = vld [vmem:[%s246 + $0xc] sm:$0xf]
      %v311 = vld [vmem:[%s246 + $0x10] sm:$0xf]
      %v312 = vld [vmem:[%s246 + $0x14] sm:$0xf]
      %v313 = vld [vmem:[%s246 + $0x18] sm:$0xf]
      %v314 = vld [vmem:[%s246 + $0x1c] sm:$0xf]
      %v315 = vld [vmem:[%s246 + $0x20] sm:$0xf]
      %v316 = vld [vmem:[%s246 + $0x24] sm:$0xf]
      %v317 = vld [vmem:[%s246 + $0x28] sm:$0xf]
      %v318 = vld [vmem:[%s246 + $0x2c] sm:$0xf]
      %v319 = vld [vmem:[%s246 + $0x30] sm:$0xf]
      %v320 = vld [vmem:[%s246 + $0x34] sm:$0xf]
      %v321 = vld [vmem:[%s246 + $0x38] sm:$0xf]
      %v322 = vld [vmem:[%s246 + $0x3c] sm:$0xf]
      %v323 = vld [vmem:[%s246 + $0x40] sm:$0xf]
      %v324 = vld [vmem:[%s246 + $0x44] sm:$0xf]
      %v325 = vld [vmem:[%s246 + $0x48] sm:$0xf]
      %v326 = vld [vmem:[%s246 + $0x4c] sm:$0xf]
      %v327 = vld [vmem:[%s246 + $0x50] sm:$0xf]
      %v328 = vld [vmem:[%s246 + $0x54] sm:$0xf]
      %v329 = vld [vmem:[%s246 + $0x58] sm:$0xf]
      %v330 = vld [vmem:[%s246 + $0x5c] sm:$0xf]
      %v331 = vld [vmem:[%s246 + $0x60] sm:$0xf]
      %v332 = vld [vmem:[%s246 + $0x64] sm:$0xf]
      %v333 = vld [vmem:[%s246 + $0x68] sm:$0xf]
      %v334 = vld [vmem:[%s246 + $0x6c] sm:$0xf]
      %v335 = vld [vmem:[%s246 + $0x70] sm:$0xf]
      %v336 = vld [vmem:[%s246 + $0x74] sm:$0xf]
      %v337 = vld [vmem:[%s246 + $0x78] sm:$0xf]
      %v338 = vld [vmem:[%s246 + $0x7c] sm:$0xf]
      %v355 = vunpack.c.l.b16 %v291
      %v356 = vunpack.c.h.b16 %v291
      %v357 = vunpack.c.l.b16 %v292
      %v358 = vunpack.c.h.b16 %v292
      %v359 = vunpack.c.l.b16 %v293
      %v360 = vunpack.c.h.b16 %v293
      %v361 = vunpack.c.l.b16 %v294
      %v362 = vunpack.c.h.b16 %v294
      %v363 = vunpack.c.l.b16 %v295
      %v364 = vunpack.c.h.b16 %v295
      %v365 = vunpack.c.l.b16 %v296
      %v366 = vunpack.c.h.b16 %v296
      %v367 = vunpack.c.l.b16 %v297
      %v368 = vunpack.c.h.b16 %v297
      %v369 = vunpack.c.l.b16 %v298
      %v370 = vunpack.c.h.b16 %v298
      %v371 = vunpack.c.l.b16 %v299
      %v372 = vunpack.c.h.b16 %v299
      %v373 = vunpack.c.l.b16 %v300
      %v374 = vunpack.c.h.b16 %v300
      %v375 = vunpack.c.l.b16 %v301
      %v376 = vunpack.c.h.b16 %v301
      %v377 = vunpack.c.l.b16 %v302
      %v378 = vunpack.c.h.b16 %v302
      %v379 = vunpack.c.l.b16 %v303
      %v380 = vunpack.c.h.b16 %v303
      %v381 = vunpack.c.l.b16 %v304
      %v382 = vunpack.c.h.b16 %v304
      %v383 = vunpack.c.l.b16 %v305
      %v384 = vunpack.c.h.b16 %v305
      %v385 = vunpack.c.l.b16 %v306
      %v386 = vunpack.c.h.b16 %v306
      %v387 = vpack.c.b16 %v357, %v355
      %v388 = vpack.c.b16 %v358, %v356
      %v389 = vpack.c.b16 %v361, %v359
      %v390 = vpack.c.b16 %v362, %v360
      %v391 = vpack.c.b16 %v365, %v363
      %v392 = vpack.c.b16 %v366, %v364
      %v393 = vpack.c.b16 %v369, %v367
      %v394 = vpack.c.b16 %v370, %v368
      %v395 = vpack.c.b16 %v373, %v371
      %v396 = vpack.c.b16 %v374, %v372
      %v397 = vpack.c.b16 %v377, %v375
      %v398 = vpack.c.b16 %v378, %v376
      %v399 = vpack.c.b16 %v381, %v379
      %v400 = vpack.c.b16 %v382, %v380
      %v401 = vpack.c.b16 %v385, %v383
      %v402 = vpack.c.b16 %v386, %v384
      %v451 = vunpack.c.l.b16 %v307
      %v452 = vunpack.c.l.b16 %v308
      %v453 = vunpack.c.l.b16 %v309
      %v454 = vunpack.c.l.b16 %v310
      %v455 = vunpack.c.l.b16 %v311
      %v456 = vunpack.c.l.b16 %v312
      %v457 = vunpack.c.l.b16 %v313
      %v458 = vunpack.c.l.b16 %v314
      %v459 = vunpack.c.l.b16 %v315
      %v460 = vunpack.c.l.b16 %v316
      %v461 = vunpack.c.l.b16 %v317
      %v462 = vunpack.c.l.b16 %v318
      %v463 = vunpack.c.l.b16 %v319
      %v464 = vunpack.c.l.b16 %v320
      %v465 = vunpack.c.l.b16 %v321
      %v466 = vunpack.c.l.b16 %v322
      %v467 = vunpack.c.l.b16 %v323
      %v468 = vunpack.c.l.b16 %v324
      %v469 = vunpack.c.l.b16 %v325
      %v470 = vunpack.c.l.b16 %v326
      %v471 = vunpack.c.l.b16 %v327
      %v472 = vunpack.c.l.b16 %v328
      %v473 = vunpack.c.l.b16 %v329
      %v474 = vunpack.c.l.b16 %v330
      %v475 = vunpack.c.l.b16 %v331
      %v476 = vunpack.c.l.b16 %v332
      %v477 = vunpack.c.l.b16 %v333
      %v478 = vunpack.c.l.b16 %v334
      %v479 = vunpack.c.l.b16 %v335
      %v480 = vunpack.c.l.b16 %v336
      %v481 = vunpack.c.l.b16 %v337
      %v482 = vunpack.c.l.b16 %v338
      %v483 = vpack.c.b16 %v452, %v451
      %v484 = vpack.c.b16 %v454, %v453
      %v485 = vpack.c.b16 %v456, %v455
      %v486 = vpack.c.b16 %v458, %v457
      %v487 = vpack.c.b16 %v460, %v459
      %v488 = vpack.c.b16 %v462, %v461
      %v489 = vpack.c.b16 %v464, %v463
      %v490 = vpack.c.b16 %v466, %v465
      %v491 = vpack.c.b16 %v468, %v467
      %v492 = vpack.c.b16 %v470, %v469
      %v493 = vpack.c.b16 %v472, %v471
      %v494 = vpack.c.b16 %v474, %v473
      %v495 = vpack.c.b16 %v476, %v475
      %v496 = vpack.c.b16 %v478, %v477
      %v497 = vpack.c.b16 %v480, %v479
      %v498 = vpack.c.b16 %v482, %v481
      %515 = vmatprep.subr.bf16.mxu0 0
      %516 = vmatpush1.bf16.msra.mxu0 %v483
      %517 = vmatprep.subr.bf16.mxu0 0
      %518 = vmatpush1.bf16.msra.mxu0 %v484
      %519 = vmatprep.subr.bf16.mxu0 0
      %520 = vmatpush1.bf16.msra.mxu0 %v485
      %521 = vmatprep.subr.bf16.mxu0 0
      %522 = vmatpush1.bf16.msra.mxu0 %v486
      %523 = vmatprep.subr.bf16.mxu0 0
      %524 = vmatpush1.bf16.msra.mxu0 %v487
      %525 = vmatprep.subr.bf16.mxu0 0
      %526 = vmatpush1.bf16.msra.mxu0 %v488
      %527 = vmatprep.subr.bf16.mxu0 0
      %528 = vmatpush1.bf16.msra.mxu0 %v489
      %529 = vmatprep.subr.bf16.mxu0 0
      %530 = vmatpush1.bf16.msra.mxu0 %v490
      %531 = vmatprep.subr.bf16.mxu0 0
      %532 = vmatpush1.bf16.msra.mxu0 %v491
      %533 = vmatprep.subr.bf16.mxu0 0
      %534 = vmatpush1.bf16.msra.mxu0 %v492
      %535 = vmatprep.subr.bf16.mxu0 0
      %536 = vmatpush1.bf16.msra.mxu0 %v493
      %537 = vmatprep.subr.bf16.mxu0 0
      %538 = vmatpush1.bf16.msra.mxu0 %v494
      %539 = vmatprep.subr.bf16.mxu0 0
      %540 = vmatpush1.bf16.msra.mxu0 %v495
      %541 = vmatprep.subr.bf16.mxu0 0
      %542 = vmatpush1.bf16.msra.mxu0 %v496
      %543 = vmatprep.subr.bf16.mxu0 0
      %544 = vmatpush1.bf16.msra.mxu0 %v497
      %545 = vmatprep.subr.bf16.mxu0 0
      %546 = vmatpush1.bf16.msra.mxu0 %v498
      %547 = vmatprep.mubr.bf16.mxu0 %v388
      %548 = vmatmul.mubr.bf16.gmra.mrb[0].mxu0 %v387
      %v549 = vpop.f32.mrb[0].mxu0
      %v550 = vadd.f32 0.0, %v549
      %v551 = vpop.f32.mrb[0].mxu0
      %v552 = vpop.f32.mrb[0].mxu0
      %v553 = vadd.f32 0.0, %v552
      %v554 = vpop.f32.mrb[0].mxu0
      %555 = vmatprep.mubr.bf16.mxu0 %v390
      %556 = vmatmul.mubr.bf16.gmra.mrb[0].mxu0 %v389
      %v557 = vpop.f32.mrb[0].mxu0
      %v558 = vadd.f32 0.0, %v557
      %v559 = vpop.f32.mrb[0].mxu0
      %v560 = vpop.f32.mrb[0].mxu0
      %v561 = vadd.f32 0.0, %v560
      %v562 = vpop.f32.mrb[0].mxu0
      %563 = vmatprep.mubr.bf16.mxu0 %v392
      %564 = vmatmul.mubr.bf16.gmra.mrb[0].mxu0 %v391
      %v565 = vpop.f32.mrb[0].mxu0
      %v566 = vadd.f32 0.0, %v565
      %v567 = vpop.f32.mrb[0].mxu0
      %v568 = vpop.f32.mrb[0].mxu0
      %v569 = vadd.f32 0.0, %v568
      %v570 = vpop.f32.mrb[0].mxu0
      %571 = vmatprep.mubr.bf16.mxu0 %v394
      %572 = vmatmul.mubr.bf16.gmra.mrb[0].mxu0 %v393
      %v573 = vpop.f32.mrb[0].mxu0
      %v574 = vadd.f32 0.0, %v573
      %v575 = vpop.f32.mrb[0].mxu0
      %v576 = vpop.f32.mrb[0].mxu0
      %v577 = vadd.f32 0.0, %v576
      %v578 = vpop.f32.mrb[0].mxu0
      %579 = vmatprep.mubr.bf16.mxu0 %v396
      %580 = vmatmul.mubr.bf16.gmra.mrb[0].mxu0 %v395
      %v581 = vpop.f32.mrb[0].mxu0
      %v582 = vadd.f32 0.0, %v581
      %v583 = vpop.f32.mrb[0].mxu0
      %v584 = vpop.f32.mrb[0].mxu0
      %v585 = vadd.f32 0.0, %v584
      %v586 = vpop.f32.mrb[0].mxu0
      %587 = vmatprep.mubr.bf16.mxu0 %v398
      %588 = vmatmul.mubr.bf16.gmra.mrb[0].mxu0 %v397
      %v589 = vpop.f32.mrb[0].mxu0
      %v590 = vadd.f32 0.0, %v589
      %v591 = vpop.f32.mrb[0].mxu0
      %v592 = vpop.f32.mrb[0].mxu0
      %v593 = vadd.f32 0.0, %v592
      %v594 = vpop.f32.mrb[0].mxu0
      %595 = vmatprep.mubr.bf16.mxu0 %v400
      %596 = vmatmul.mubr.bf16.gmra.mrb[0].mxu0 %v399
      %v597 = vpop.f32.mrb[0].mxu0
      %v598 = vadd.f32 0.0, %v597
      %v599 = vpop.f32.mrb[0].mxu0
      %v600 = vpop.f32.mrb[0].mxu0
      %v601 = vadd.f32 0.0, %v600
      %v602 = vpop.f32.mrb[0].mxu0
      %603 = vmatprep.mubr.bf16.mxu0 %v402
      %604 = vmatmul.mubr.bf16.gmra.mrb[0].mxu0 %v401
      %v605 = vpop.f32.mrb[0].mxu0
      %v606 = vadd.f32 0.0, %v605
      %v607 = vpop.f32.mrb[0].mxu0
      %v608 = vpop.f32.mrb[0].mxu0
      %v609 = vadd.f32 0.0, %v608
      %v610 = vpop.f32.mrb[0].mxu0
      %611 = vdwg.mxu0
      %v612 = vadd.f32 %v275, %v550
      %v613 = vadd.f32 %v276, %v553
      %v614 = vadd.f32 %v277, %v558
      %v615 = vadd.f32 %v278, %v561
      %v616 = vadd.f32 %v279, %v566
      %v617 = vadd.f32 %v280, %v569
      %v618 = vadd.f32 %v281, %v574
      %v619 = vadd.f32 %v282, %v577
      %v620 = vadd.f32 %v283, %v582
      %v621 = vadd.f32 %v284, %v585
      %v622 = vadd.f32 %v285, %v590
      %v623 = vadd.f32 %v286, %v593
      %v624 = vadd.f32 %v287, %v598
      %v625 = vadd.f32 %v288, %v601
      %v626 = vadd.f32 %v289, %v606
      %v627 = vadd.f32 %v290, %v609
      %628 = vst [vmem:[#allocation2] sm:$0xff] %v612
      %629 = vst [vmem:[#allocation2 + $0x8] sm:$0xff] %v613
      %630 = vst [vmem:[#allocation2 + $0x10] sm:$0xff] %v614
      %631 = vst [vmem:[#allocation2 + $0x18] sm:$0xff] %v615
      %632 = vst [vmem:[#allocation2 + $0x20] sm:$0xff] %v616
      %633 = vst [vmem:[#allocation2 + $0x28] sm:$0xff] %v617
      %634 = vst [vmem:[#allocation2 + $0x30] sm:$0xff] %v618
      %635 = vst [vmem:[#allocation2 + $0x38] sm:$0xff] %v619
      %636 = vst [vmem:[#allocation2 + $0x40] sm:$0xff] %v620
      %637 = vst [vmem:[#allocation2 + $0x48] sm:$0xff] %v621
      %638 = vst [vmem:[#allocation2 + $0x50] sm:$0xff] %v622
      %639 = vst [vmem:[#allocation2 + $0x58] sm:$0xff] %v623
      %640 = vst [vmem:[#allocation2 + $0x60] sm:$0xff] %v624
      %641 = vst [vmem:[#allocation2 + $0x68] sm:$0xff] %v625
      %642 = vst [vmem:[#allocation2 + $0x70] sm:$0xff] %v626
      %643 = vst [vmem:[#allocation2 + $0x78] sm:$0xff] %v627
      // Predicated region
      $region41: #{_lambda_.4} parent=35 // pred_check
        %p644 = pneg %p255
      $region42: #{_lambda_.4} parent=35 // pred_check_branch
        %646 = sbr.rel (%p644) target = $region44
      $region43: #{_lambda_.4} parent=35 // pred_region
        %v647 = vld [vmem:[#allocation2] sm:$0xff]
        %v648 = vld [vmem:[#allocation2 + $0x8] sm:$0xff]
        %v649 = vld [vmem:[#allocation2 + $0x10] sm:$0xff]
        %v650 = vld [vmem:[#allocation2 + $0x18] sm:$0xff]
        %v651 = vld [vmem:[#allocation2 + $0x20] sm:$0xff]
        %v652 = vld [vmem:[#allocation2 + $0x28] sm:$0xff]
        %v653 = vld [vmem:[#allocation2 + $0x30] sm:$0xff]
        %v654 = vld [vmem:[#allocation2 + $0x38] sm:$0xff]
        %v655 = vld [vmem:[#allocation2 + $0x40] sm:$0xff]
        %v656 = vld [vmem:[#allocation2 + $0x48] sm:$0xff]
        %v657 = vld [vmem:[#allocation2 + $0x50] sm:$0xff]
        %v658 = vld [vmem:[#allocation2 + $0x58] sm:$0xff]
        %v659 = vld [vmem:[#allocation2 + $0x60] sm:$0xff]
        %v660 = vld [vmem:[#allocation2 + $0x68] sm:$0xff]
        %v661 = vld [vmem:[#allocation2 + $0x70] sm:$0xff]
        %v662 = vld [vmem:[#allocation2 + $0x78] sm:$0xff]
        %v663 = vld [vmem:[%s2] sm:$0x1]
        %v665 = vlaneseq
        %v666 = vshrl.u32 %v665, 7
        %v667 = vsub.s32 0, %v666
        %v668 = vrot.slane %v663, %v667
        %v670 = vadd.f32 %v647, %v668
        %v671 = vadd.f32 %v648, %v668
        %v672 = vadd.f32 %v649, %v668
        %v673 = vadd.f32 %v650, %v668
        %v674 = vadd.f32 %v651, %v668
        %v675 = vadd.f32 %v652, %v668
        %v676 = vadd.f32 %v653, %v668
        %v677 = vadd.f32 %v654, %v668
        %v678 = vadd.f32 %v655, %v668
        %v679 = vadd.f32 %v656, %v668
        %v680 = vadd.f32 %v657, %v668
        %v681 = vadd.f32 %v658, %v668
        %v682 = vadd.f32 %v659, %v668
        %v683 = vadd.f32 %v660, %v668
        %v684 = vadd.f32 %v661, %v668
        %v685 = vadd.f32 %v662, %v668
        %v686 = vmax.f32 %v670, 0.0
        %v687 = vmax.f32 %v671, 0.0
        %v688 = vmax.f32 %v672, 0.0
        %v689 = vmax.f32 %v673, 0.0
        %v690 = vmax.f32 %v674, 0.0
        %v691 = vmax.f32 %v675, 0.0
        %v692 = vmax.f32 %v676, 0.0
        %v693 = vmax.f32 %v677, 0.0
        %v694 = vmax.f32 %v678, 0.0
        %v695 = vmax.f32 %v679, 0.0
        %v696 = vmax.f32 %v680, 0.0
        %v697 = vmax.f32 %v681, 0.0
        %v698 = vmax.f32 %v682, 0.0
        %v699 = vmax.f32 %v683, 0.0
        %v700 = vmax.f32 %v684, 0.0
        %v701 = vmax.f32 %v685, 0.0
        %v702 = vpack.c.bf16 %v687, %v686
        %v703 = vpack.c.bf16 %v689, %v688
        %v704 = vpack.c.bf16 %v691, %v690
        %v705 = vpack.c.bf16 %v693, %v692
        %v706 = vpack.c.bf16 %v695, %v694
        %v707 = vpack.c.bf16 %v697, %v696
        %v708 = vpack.c.bf16 %v699, %v698
        %v709 = vpack.c.bf16 %v701, %v700
        %v710 = vld [vmem:[%s3] sm:$0xf]
        %v711 = vld [vmem:[%s3 + $0x4] sm:$0xf]
        %v712 = vld [vmem:[%s3 + $0x8] sm:$0xf]
        %v713 = vld [vmem:[%s3 + $0xc] sm:$0xf]
        %v714 = vld [vmem:[%s3 + $0x10] sm:$0xf]
        %v715 = vld [vmem:[%s3 + $0x14] sm:$0xf]
        %v716 = vld [vmem:[%s3 + $0x18] sm:$0xf]
        %v717 = vld [vmem:[%s3 + $0x1c] sm:$0xf]
        %v718 = vld [vmem:[%s3 + $0x20] sm:$0xf]
        %v719 = vld [vmem:[%s3 + $0x24] sm:$0xf]
        %v720 = vld [vmem:[%s3 + $0x28] sm:$0xf]
        %v721 = vld [vmem:[%s3 + $0x2c] sm:$0xf]
        %v722 = vld [vmem:[%s3 + $0x30] sm:$0xf]
        %v723 = vld [vmem:[%s3 + $0x34] sm:$0xf]
        %v724 = vld [vmem:[%s3 + $0x38] sm:$0xf]
        %v725 = vld [vmem:[%s3 + $0x3c] sm:$0xf]
        %v742 = vunpack.c.l.b16 %v710
        %v743 = vunpack.c.l.b16 %v711
        %v744 = vunpack.c.l.b16 %v712
        %v745 = vunpack.c.l.b16 %v713
        %v746 = vunpack.c.l.b16 %v714
        %v747 = vunpack.c.l.b16 %v715
        %v748 = vunpack.c.l.b16 %v716
        %v749 = vunpack.c.l.b16 %v717
        %v750 = vunpack.c.l.b16 %v718
        %v751 = vunpack.c.l.b16 %v719
        %v752 = vunpack.c.l.b16 %v720
        %v753 = vunpack.c.l.b16 %v721
        %v754 = vunpack.c.l.b16 %v722
        %v755 = vunpack.c.l.b16 %v723
        %v756 = vunpack.c.l.b16 %v724
        %v757 = vunpack.c.l.b16 %v725
        %v758 = vpack.c.b16 %v743, %v742
        %v759 = vpack.c.b16 %v745, %v744
        %v760 = vpack.c.b16 %v747, %v746
        %v761 = vpack.c.b16 %v749, %v748
        %v762 = vpack.c.b16 %v751, %v750
        %v763 = vpack.c.b16 %v753, %v752
        %v764 = vpack.c.b16 %v755, %v754
        %v765 = vpack.c.b16 %v757, %v756
        %774 = vmatprep.subr.bf16.mxu0 0
        %775 = vmatpush1.bf16.msra.mxu0 %v758
        %776 = vmatprep.subr.bf16.mxu0 0
        %777 = vmatpush1.bf16.msra.mxu0 %v759
        %778 = vmatprep.subr.bf16.mxu0 0
        %779 = vmatpush1.bf16.msra.mxu0 %v760
        %780 = vmatprep.subr.bf16.mxu0 0
        %781 = vmatpush1.bf16.msra.mxu0 %v761
        %782 = vmatprep.subr.bf16.mxu0 0
        %783 = vmatpush1.bf16.msra.mxu0 %v762
        %784 = vmatprep.subr.bf16.mxu0 0
        %785 = vmatpush1.bf16.msra.mxu0 %v763
        %786 = vmatprep.subr.bf16.mxu0 0
        %787 = vmatpush1.bf16.msra.mxu0 %v764
        %788 = vmatprep.subr.bf16.mxu0 0
        %789 = vmatpush1.bf16.msra.mxu0 %v765
        %790 = vmatprep.subr.bf16.mxu0 0
        %791 = vmatpush1.bf16.msra.mxu0 0
        %792 = vmatprep.subr.bf16.mxu0 0
        %793 = vmatpush1.bf16.msra.mxu0 0
        %794 = vmatprep.subr.bf16.mxu0 0
        %795 = vmatpush1.bf16.msra.mxu0 0
        %796 = vmatprep.subr.bf16.mxu0 0
        %797 = vmatpush1.bf16.msra.mxu0 0
        %798 = vmatprep.subr.bf16.mxu0 0
        %799 = vmatpush1.bf16.msra.mxu0 0
        %800 = vmatprep.subr.bf16.mxu0 0
        %801 = vmatpush1.bf16.msra.mxu0 0
        %802 = vmatprep.subr.bf16.mxu0 0
        %803 = vmatpush1.bf16.msra.mxu0 0
        %804 = vmatprep.subr.bf16.mxu0 0
        %805 = vmatpush1.bf16.msra.mxu0 0
        %806 = vmatprep.mubr.bf16.mxu0 0
        %807 = vmatmul.mubr.bf16.gmra.mrb[0].mxu0 %v702
        %v808 = vpop.f32.mrb[0].mxu0
        %v809 = vadd.f32 0.0, %v808
        %v810 = vpop.f32.mrb[0].mxu0
        %v811 = vpop.f32.mrb[0].mxu0
        %v812 = vadd.f32 0.0, %v811
        %v813 = vpop.f32.mrb[0].mxu0
        %814 = vmatprep.mubr.bf16.mxu0 0
        %815 = vmatmul.mubr.bf16.gmra.mrb[0].mxu0 %v703
        %v816 = vpop.f32.mrb[0].mxu0
        %v817 = vadd.f32 0.0, %v816
        %v818 = vpop.f32.mrb[0].mxu0
        %v819 = vpop.f32.mrb[0].mxu0
        %v820 = vadd.f32 0.0, %v819
        %v821 = vpop.f32.mrb[0].mxu0
        %822 = vmatprep.mubr.bf16.mxu0 0
        %823 = vmatmul.mubr.bf16.gmra.mrb[0].mxu0 %v704
        %v824 = vpop.f32.mrb[0].mxu0
        %v825 = vadd.f32 0.0, %v824
        %v826 = vpop.f32.mrb[0].mxu0
        %v827 = vpop.f32.mrb[0].mxu0
        %v828 = vadd.f32 0.0, %v827
        %v829 = vpop.f32.mrb[0].mxu0
        %830 = vmatprep.mubr.bf16.mxu0 0
        %831 = vmatmul.mubr.bf16.gmra.mrb[0].mxu0 %v705
        %v832 = vpop.f32.mrb[0].mxu0
        %v833 = vadd.f32 0.0, %v832
        %v834 = vpop.f32.mrb[0].mxu0
        %v835 = vpop.f32.mrb[0].mxu0
        %v836 = vadd.f32 0.0, %v835
        %v837 = vpop.f32.mrb[0].mxu0
        %838 = vmatprep.mubr.bf16.mxu0 0
        %839 = vmatmul.mubr.bf16.gmra.mrb[0].mxu0 %v706
        %v840 = vpop.f32.mrb[0].mxu0
        %v841 = vadd.f32 0.0, %v840
        %v842 = vpop.f32.mrb[0].mxu0
        %v843 = vpop.f32.mrb[0].mxu0
        %v844 = vadd.f32 0.0, %v843
        %v845 = vpop.f32.mrb[0].mxu0
        %846 = vmatprep.mubr.bf16.mxu0 0
        %847 = vmatmul.mubr.bf16.gmra.mrb[0].mxu0 %v707
        %v848 = vpop.f32.mrb[0].mxu0
        %v849 = vadd.f32 0.0, %v848
        %v850 = vpop.f32.mrb[0].mxu0
        %v851 = vpop.f32.mrb[0].mxu0
        %v852 = vadd.f32 0.0, %v851
        %v853 = vpop.f32.mrb[0].mxu0
        %854 = vmatprep.mubr.bf16.mxu0 0
        %855 = vmatmul.mubr.bf16.gmra.mrb[0].mxu0 %v708
        %v856 = vpop.f32.mrb[0].mxu0
        %v857 = vadd.f32 0.0, %v856
        %v858 = vpop.f32.mrb[0].mxu0
        %v859 = vpop.f32.mrb[0].mxu0
        %v860 = vadd.f32 0.0, %v859
        %v861 = vpop.f32.mrb[0].mxu0
        %862 = vmatprep.mubr.bf16.mxu0 0
        %863 = vmatmul.mubr.bf16.gmra.mrb[0].mxu0 %v709
        %v864 = vpop.f32.mrb[0].mxu0
        %v865 = vadd.f32 0.0, %v864
        %v866 = vpop.f32.mrb[0].mxu0
        %v867 = vpop.f32.mrb[0].mxu0
        %v868 = vadd.f32 0.0, %v867
        %v869 = vpop.f32.mrb[0].mxu0
        %870 = vdwg.mxu0
        %v871 = vpack.c.bf16 %v812, %v809
        %v872 = vpack.c.bf16 %v820, %v817
        %v873 = vpack.c.bf16 %v828, %v825
        %v874 = vpack.c.bf16 %v836, %v833
        %v875 = vpack.c.bf16 %v844, %v841
        %v876 = vpack.c.bf16 %v852, %v849
        %v877 = vpack.c.bf16 %v860, %v857
        %v878 = vpack.c.bf16 %v868, %v865
        %v887 = vunpack.c.l.b16 %v871
        %v888 = vunpack.c.h.b16 %v871
        %v889 = vunpack.c.l.b16 %v872
        %v890 = vunpack.c.h.b16 %v872
        %v891 = vunpack.c.l.b16 %v873
        %v892 = vunpack.c.h.b16 %v873
        %v893 = vunpack.c.l.b16 %v874
        %v894 = vunpack.c.h.b16 %v874
        %v895 = vunpack.c.l.b16 %v875
        %v896 = vunpack.c.h.b16 %v875
        %v897 = vunpack.c.l.b16 %v876
        %v898 = vunpack.c.h.b16 %v876
        %v899 = vunpack.c.l.b16 %v877
        %v900 = vunpack.c.h.b16 %v877
        %v901 = vunpack.c.l.b16 %v878
        %v902 = vunpack.c.h.b16 %v878
        %v903 = vpack.c.b16 %v887, %v887
        %v904 = vpack.c.b16 %v888, %v888
        %v905 = vpack.c.b16 %v889, %v889
        %v906 = vpack.c.b16 %v890, %v890
        %v907 = vpack.c.b16 %v891, %v891
        %v908 = vpack.c.b16 %v892, %v892
        %v909 = vpack.c.b16 %v893, %v893
        %v910 = vpack.c.b16 %v894, %v894
        %v911 = vpack.c.b16 %v895, %v895
        %v912 = vpack.c.b16 %v896, %v896
        %v913 = vpack.c.b16 %v897, %v897
        %v914 = vpack.c.b16 %v898, %v898
        %v915 = vpack.c.b16 %v899, %v899
        %v916 = vpack.c.b16 %v900, %v900
        %v917 = vpack.c.b16 %v901, %v901
        %v918 = vpack.c.b16 %v902, %v902
        %935 = vst [vmem:[%s252] sm:$0xf] %v903
        %936 = vst [vmem:[%s252 + $0x4] sm:$0xf] %v904
        %937 = vst [vmem:[%s252 + $0x8] sm:$0xf] %v905
        %938 = vst [vmem:[%s252 + $0xc] sm:$0xf] %v906
        %939 = vst [vmem:[%s252 + $0x10] sm:$0xf] %v907
        %940 = vst [vmem:[%s252 + $0x14] sm:$0xf] %v908
        %941 = vst [vmem:[%s252 + $0x18] sm:$0xf] %v909
        %942 = vst [vmem:[%s252 + $0x1c] sm:$0xf] %v910
        %943 = vst [vmem:[%s252 + $0x20] sm:$0xf] %v911
        %944 = vst [vmem:[%s252 + $0x24] sm:$0xf] %v912
        %945 = vst [vmem:[%s252 + $0x28] sm:$0xf] %v913
        %946 = vst [vmem:[%s252 + $0x2c] sm:$0xf] %v914
        %947 = vst [vmem:[%s252 + $0x30] sm:$0xf] %v915
        %948 = vst [vmem:[%s252 + $0x34] sm:$0xf] %v916
        %949 = vst [vmem:[%s252 + $0x38] sm:$0xf] %v917
        %950 = vst [vmem:[%s252 + $0x3c] sm:$0xf] %v918
      $region44: #{_lambda_.4} parent=35 // pred_fallthru
        _
      %s951 = smul.u32 16, %s19
      %p952 = scmp.lt.s32.totalorder %s951, 31
      %s953 = scalar_select %p952, %s951, 31
      %s954 = smul.addr %s953, 4
      %s955 = scalar_lea.vmem %s4, %s954
      // Predicated region
      $region45: #{_lambda_.4} parent=35 // pred_check
        %p956 = pneg %p141
      $region46: #{_lambda_.4} parent=35 // pred_check_branch
        %958 = sbr.rel (%p956) target = $region48
      $region47: #{_lambda_.4} parent=35 // pred_region
        %s959 = smul.u32 16, %s19
      $region48: #{_lambda_.4} parent=35 // pred_fallthru
        _
    $region36: #{_lambda_.4} parent=5 // pred_fallthru
      _
    %p960 = scmp.le.s32.totalorder 2, %s10
    // Predicated region
    $region49: #{_lambda_.4} parent=5 // pred_check
      %p961 = pneg %p960
    $region50: #{_lambda_.4} parent=5 // pred_check_branch
      %963 = sbr.rel (%p961) target = $region52
    $region51: #{_lambda_.4} parent=5 // pred_region
      %s964 = ssub.s32 %s10, 2
      // Predicated region
      $region53: #{_lambda_.4} parent=51 // pred_check
        %p965 = pneg %p147
      $region54: #{_lambda_.4} parent=51 // pred_check_branch
        %967 = sbr.rel (%p965) target = $region56
      $region55: #{_lambda_.4} parent=51 // pred_region
        %s968 = smul.u32 16, %s21
        %p969 = scmp.lt.s32.totalorder %s968, 31
        %s970 = scalar_select %p969, %s968, 31
        %s971 = smul.addr %s970, 4
        %s972 = scalar_lea.vmem %s4, %s971
      $region56: #{_lambda_.4} parent=51 // pred_fallthru
        _
    $region52: #{_lambda_.4} parent=5 // pred_fallthru
      _
  $region6: #{_lambda_.4} parent=0 // loop_footer
    %s14 = sadd.s32 1, %s10
  $region7: #{_lambda_.4} parent=0 // loop_footer_branch
    %9 = sbr.rel target = $region3
  $region8: #{_lambda_.4} parent=0 // loop_exit
    _

// kernel: _lambda_.5
$region0: #{_lambda_.5}
  #allocation0 [shape = 'u32[]', space=smem, size = 0x4, offset = 0x4, fixed_abs, tag = 'smem constant byte address 0x4 - core index']
  #allocation1 [shape = 'u32[144,128]{1,0:T(1,128)}', space=vmem, size = 0x12000, scoped, tag = 'internal scratch']
  #allocation2 [shape = 'f32[128,128]{1,0:T(8,128)}', space=vmem, size = 0x10000, scoped, tag = 'scratch operand']
  %s0 = inlined_call_operand.vmem [shape: bf16[256,256], index: 0, kind: input, shape index: {}]
  %s1 = inlined_call_operand.vmem [shape: bf16[256,128], index: 1, kind: input, shape index: {}]
  %s2 = inlined_call_operand.vmem [shape: f32[1,128], index: 2, kind: input, shape index: {}]
  %s3 = inlined_call_operand.vmem [shape: f32[256,128], index: 3, kind: output, shape index: {}]
  %s4 = sld [smem:[#allocation0]]
  $region53: #{_lambda_.5} parent=0
    _
  %s6 = ssub.s32 1, %s4
  %s7 = scalar_select 0, %s6, %s4
  loop: start=0, step=1, limit=4
  $region2: #{_lambda_.5} parent=0 // loop_pre_header
    _
  $region3: #{_lambda_.5} parent=0 // loop_header
    %s9 = sphi 0, %s13
    %p10 = scmp.ge.s32.totalorder %s9, 4
    %s16 = sphi 0, %s28
    %s17 = sphi 0, %s24
    %s18 = sphi 0, %s16
    %s19 = sphi 0, %s17
    %s20 = sphi 0, %s18
    %s21 = sphi 0, %s19
    %s33 = sphi 0, %s35
    %s36 = sphi 0, %s33
    %s37 = sphi 0, %s36
    %s53 = sphi 0, %s37
    %s59 = sphi 0, %s61
    %s62 = sphi 0, %s59
    %s63 = sphi 0, %s62
    %s79 = sphi 0, %s63
    %s83 = sphi 0, %s83
    %s85 = sphi 0, %s83
    %s86 = sphi 0, %s85
    %s100 = sphi 0, %s86
    %s106 = sphi 0, %s108
    %s109 = sphi 0, %s106
    %s110 = sphi 0, %s109
    %s126 = sphi 0, %s110
  $region4: #{_lambda_.5} parent=0 // loop_header_branch
    %12 = sbr.rel (%p10) target = $region8
  $region5: #{_lambda_.5} parent=0 // loop_body
    %s14 = ssub.s32 %s9, 1
    %s15 = ssub.s32 %s9, 2
    %s22 = sadd.s32 1, %s17
    %p23 = scmp.ge.s32.totalorder %s22, 1
    %s24 = scalar_select %p23, 0, %s22
    %s25 = sadd.s32 1, %s16
    %s26 = scalar_select %p23, %s25, %s16
    %p27 = scmp.ge.s32.totalorder %s26, 2
    %s28 = scalar_select %p27, 0, %s26
    %s29 = ssub.s32 %s16, %s28
    %s30 = ssub.s32 %s17, %s24
    %s31 = sor.u32 %s29, %s30
    %p32 = scmp.eq.s32.totalorder %s31, 0
    %s34 = sadd.s32 %s33, 1
    %s35 = scalar_select %p32, %s33, %s34
    %p38 = pneg %p32
    %p39 = scmp.eq.s32.totalorder %s9, 1
    %p40 = por %p38, %p39
    %p41 = scmp.ne.s32.totalorder %s33, %s36
    %p42 = scmp.eq.s32.totalorder %s9, 0
    %p43 = por %p41, %p42
    %p44 = scmp.ne.s32.totalorder %s33, %s36
    %p45 = scmp.eq.s32.totalorder %s14, 1
    %p46 = por %p44, %p45
    %p47 = scmp.ne.s32.totalorder %s36, %s37
    %p48 = scmp.eq.s32.totalorder %s14, 0
    %p49 = por %p47, %p48
    %p50 = scmp.ne.s32.totalorder %s36, %s37
    %p51 = scmp.eq.s32.totalorder %s15, 1
    %p52 = por %p50, %p51
    %p54 = scmp.ne.s32.totalorder %s37, %s53
    %p55 = scmp.eq.s32.totalorder %s15, 0
    %p56 = por %p54, %p55
    %s57 = ssub.s32 %s17, %s24
    %p58 = scmp.eq.s32.totalorder %s57, 0
    %s60 = sadd.s32 %s59, 1
    %s61 = scalar_select %p58, %s59, %s60
    %p64 = pneg %p58
    %p65 = scmp.eq.s32.totalorder %s9, 1
    %p66 = por %p64, %p65
    %p67 = scmp.ne.s32.totalorder %s59, %s62
    %p68 = scmp.eq.s32.totalorder %s9, 0
    %p69 = por %p67, %p68
    %p70 = scmp.ne.s32.totalorder %s59, %s62
    %p71 = scmp.eq.s32.totalorder %s14, 1
    %p72 = por %p70, %p71
    %p73 = scmp.ne.s32.totalorder %s62, %s63
    %p74 = scmp.eq.s32.totalorder %s14, 0
    %p75 = por %p73, %p74
    %p76 = scmp.ne.s32.totalorder %s62, %s63
    %p77 = scmp.eq.s32.totalorder %s15, 1
    %p78 = por %p76, %p77
    %p80 = scmp.ne.s32.totalorder %s63, %s79
    %p81 = scmp.eq.s32.totalorder %s15, 0
    %p82 = por %p80, %p81
    %s84 = sadd.s32 %s83, 1
    %p87 = scmp.eq.s32.totalorder %s9, 1
    %p88 = scmp.ne.s32.totalorder %s83, %s85
    %p89 = scmp.eq.s32.totalorder %s9, 0
    %p90 = por %p88, %p89
    %p91 = scmp.ne.s32.totalorder %s83, %s85
    %p92 = scmp.eq.s32.totalorder %s14, 1
    %p93 = por %p91, %p92
    %p94 = scmp.ne.s32.totalorder %s85, %s86
    %p95 = scmp.eq.s32.totalorder %s14, 0
    %p96 = por %p94, %p95
    %p97 = scmp.ne.s32.totalorder %s85, %s86
    %p98 = scmp.eq.s32.totalorder %s15, 1
    %p99 = por %p97, %p98
    %p101 = scmp.ne.s32.totalorder %s86, %s100
    %p102 = scmp.eq.s32.totalorder %s15, 0
    %p103 = por %p101, %p102
    %s104 = ssub.s32 %s16, %s28
    %p105 = scmp.eq.s32.totalorder %s104, 0
    %s107 = sadd.s32 %s106, 1
    %s108 = scalar_select %p105, %s106, %s107
    %p111 = pneg %p105
    %p112 = scmp.eq.s32.totalorder %s9, 1
    %p113 = por %p111, %p112
    %p114 = scmp.ne.s32.totalorder %s106, %s109
    %p115 = scmp.eq.s32.totalorder %s9, 0
    %p116 = por %p114, %p115
    %p117 = scmp.ne.s32.totalorder %s106, %s109
    %p118 = scmp.eq.s32.totalorder %s14, 1
    %p119 = por %p117, %p118
    %p120 = scmp.ne.s32.totalorder %s109, %s110
    %p121 = scmp.eq.s32.totalorder %s14, 0
    %p122 = por %p120, %p121
    %p123 = scmp.ne.s32.totalorder %s109, %s110
    %p124 = scmp.eq.s32.totalorder %s15, 1
    %p125 = por %p123, %p124
    %p127 = scmp.ne.s32.totalorder %s110, %s126
    %p128 = scmp.eq.s32.totalorder %s15, 0
    %p129 = por %p127, %p128
    %p130 = scmp.le.s32.totalorder 1, %s9
    %p131 = scmp.lt.s32.totalorder %s9, 3
    %p132 = pnand %p130, %p131
    %p133 = pneg %p132
    // Predicated region
    $region9: #{_lambda_.5} parent=5 // pred_check
      _
    $region10: #{_lambda_.5} parent=5 // pred_check_branch
      %135 = sbr.rel (%p132) target = $region12
    $region11: #{_lambda_.5} parent=5 // pred_region
      %s136 = ssub.s32 %s9, 1
      // Predicated region
      $region13: #{_lambda_.5} parent=11 // pred_check
        %p137 = pneg %p75
      $region14: #{_lambda_.5} parent=11 // pred_check_branch
        %139 = sbr.rel (%p137) target = $region16
      $region15: #{_lambda_.5} parent=11 // pred_region
        %s140 = smul.u32 32, %s19
        %p141 = scmp.lt.s32.totalorder %s140, 31
        %s142 = scalar_select %p141, %s140, 31
        %s143 = smul.addr %s142, 4
        %s144 = scalar_lea.vmem %s1, %s143
        %s145 = smul.u32 32, %s19
      $region16: #{_lambda_.5} parent=11 // pred_fallthru
        _
      // Predicated region
      $region17: #{_lambda_.5} parent=11 // pred_check
        %p146 = pneg %p96
      $region18: #{_lambda_.5} parent=11 // pred_check_branch
        %148 = sbr.rel (%p146) target = $region20
      $region19: #{_lambda_.5} parent=11 // pred_region
        _
      $region20: #{_lambda_.5} parent=11 // pred_fallthru
        _
    $region12: #{_lambda_.5} parent=5 // pred_fallthru
      _
    %p149 = scmp.lt.s32.totalorder %s9, 2
    // Predicated region
    $region21: #{_lambda_.5} parent=5 // pred_check
      %p150 = pneg %p149
    $region22: #{_lambda_.5} parent=5 // pred_check_branch
      %152 = sbr.rel (%p150) target = $region24
    $region23: #{_lambda_.5} parent=5 // pred_region
      // Predicated region
      $region25: #{_lambda_.5} parent=23 // pred_check
        %p153 = pneg %p43
      $region26: #{_lambda_.5} parent=23 // pred_check_branch
        %155 = sbr.rel (%p153) target = $region28
      $region27: #{_lambda_.5} parent=23 // pred_region
        %s156 = smul.u32 16, %s16
        %s157 = smul.u32 2, %s17
        %p158 = scmp.lt.s32.totalorder %s156, 31
        %s159 = scalar_select %p158, %s156, 31
        %p160 = scmp.lt.s32.totalorder %s157, 1
        %s161 = scalar_select %p160, %s157, 1
        %s162 = smul.addr %s159, 2
        %s163 = sadd.s32 %s161, %s162
        %s164 = smul.addr %s163, 4
        %s165 = scalar_lea.vmem %s0, %s164
        %s166 = smul.u32 16, %s16
        %s167 = smul.u32 2, %s17
      $region28: #{_lambda_.5} parent=23 // pred_fallthru
        _
    $region24: #{_lambda_.5} parent=5 // pred_fallthru
      _
    %p168 = scmp.le.s32.totalorder 1, %s9
    %p169 = scmp.lt.s32.totalorder %s9, 3
    %p170 = pnand %p168, %p169
    %p171 = pneg %p170
    // Predicated region
    $region29: #{_lambda_.5} parent=5 // pred_check
      _
    $region30: #{_lambda_.5} parent=5 // pred_check_branch
      %173 = sbr.rel (%p170) target = $region32
    $region31: #{_lambda_.5} parent=5 // pred_region
      %s174 = ssub.s32 %s9, 1
      %s175 = smul.u32 16, %s18
      %s176 = smul.u32 2, %s19
      %p177 = scmp.lt.s32.totalorder %s175, 31
      %s178 = scalar_select %p177, %s175, 31
      %p179 = scmp.lt.s32.totalorder %s176, 1
      %s180 = scalar_select %p179, %s176, 1
      %s181 = smul.addr %s178, 2
      %s182 = sadd.s32 %s180, %s181
      %s183 = smul.addr %s182, 4
      %s184 = scalar_lea.vmem %s0, %s183
      %p185 = pneg %p49
      %p186 = pneg %p46
      %s187 = smul.u32 32, %s19
      %p188 = scmp.lt.s32.totalorder %s187, 31
      %s189 = scalar_select %p188, %s187, 31
      %s190 = smul.addr %s189, 4
      %s191 = scalar_lea.vmem %s1, %s190
      %p192 = pneg %p75
      %p193 = pneg %p72
      %p194 = pneg %p96
      %p195 = pneg %p93
      %p196 = pneg %p122
      %p197 = pneg %p119
      %s198 = smul.u32 16, %s18
      %p199 = scmp.lt.s32.totalorder %s198, 31
      %s200 = scalar_select %p199, %s198, 31
      %s201 = smul.addr %s200, 8
      %s202 = scalar_lea.vmem %s3, %s201
      %s203 = smul.u32 16, %s18
      %s204 = smul.u32 2, %s19
      %p205 = scmp.lt.s32.totalorder %s203, 31
      %s206 = scalar_select %p205, %s203, 31
      %p207 = scmp.lt.s32.totalorder %s204, 1
      %s208 = scalar_select %p207, %s204, 1
      %s209 = smul.addr %s206, 2
      %s210 = sadd.s32 %s208, %s209
      %s211 = smul.addr %s210, 4
      %s212 = scalar_lea.vmem %s0, %s211
      %s213 = smul.u32 16, %s18
      %s214 = smul.u32 2, %s19
      %s215 = smul.u32 32, %s19
      %p216 = scmp.lt.s32.totalorder %s215, 31
      %s217 = scalar_select %p216, %s215, 31
      %s218 = smul.addr %s217, 4
      %s219 = scalar_lea.vmem %s1, %s218
      %s220 = smul.u32 32, %s19
      %s221 = smul.u32 16, %s18
      %p222 = scmp.lt.s32.totalorder %s221, 31
      %s223 = scalar_select %p222, %s221, 31
      %s224 = smul.addr %s223, 8
      %s225 = scalar_lea.vmem %s3, %s224
      %s226 = smul.u32 16, %s18
      %p228 = scmp.eq.s32.totalorder %s19, 0
      // Predicated region
      $region33: #{_lambda_.5} parent=31 // pred_check
        %p229 = pneg %p228
      $region34: #{_lambda_.5} parent=31 // pred_check_branch
        %231 = sbr.rel (%p229) target = $region36
      $region35: #{_lambda_.5} parent=31 // pred_region
        %232 = vst [vmem:[#allocation2] sm:$0xff] 0.0
        %233 = vst [vmem:[#allocation2 + $0x8] sm:$0xff] 0.0
        %234 = vst [vmem:[#allocation2 + $0x10] sm:$0xff] 0.0
        %235 = vst [vmem:[#allocation2 + $0x18] sm:$0xff] 0.0
        %236 = vst [vmem:[#allocation2 + $0x20] sm:$0xff] 0.0
        %237 = vst [vmem:[#allocation2 + $0x28] sm:$0xff] 0.0
        %238 = vst [vmem:[#allocation2 + $0x30] sm:$0xff] 0.0
        %239 = vst [vmem:[#allocation2 + $0x38] sm:$0xff] 0.0
        %240 = vst [vmem:[#allocation2 + $0x40] sm:$0xff] 0.0
        %241 = vst [vmem:[#allocation2 + $0x48] sm:$0xff] 0.0
        %242 = vst [vmem:[#allocation2 + $0x50] sm:$0xff] 0.0
        %243 = vst [vmem:[#allocation2 + $0x58] sm:$0xff] 0.0
        %244 = vst [vmem:[#allocation2 + $0x60] sm:$0xff] 0.0
        %245 = vst [vmem:[#allocation2 + $0x68] sm:$0xff] 0.0
        %246 = vst [vmem:[#allocation2 + $0x70] sm:$0xff] 0.0
        %247 = vst [vmem:[#allocation2 + $0x78] sm:$0xff] 0.0
      $region36: #{_lambda_.5} parent=31 // pred_fallthru
        _
      %v248 = vld [vmem:[#allocation2] sm:$0xff]
      %v249 = vld [vmem:[#allocation2 + $0x8] sm:$0xff]
      %v250 = vld [vmem:[#allocation2 + $0x10] sm:$0xff]
      %v251 = vld [vmem:[#allocation2 + $0x18] sm:$0xff]
      %v252 = vld [vmem:[#allocation2 + $0x20] sm:$0xff]
      %v253 = vld [vmem:[#allocation2 + $0x28] sm:$0xff]
      %v254 = vld [vmem:[#allocation2 + $0x30] sm:$0xff]
      %v255 = vld [vmem:[#allocation2 + $0x38] sm:$0xff]
      %v256 = vld [vmem:[#allocation2 + $0x40] sm:$0xff]
      %v257 = vld [vmem:[#allocation2 + $0x48] sm:$0xff]
      %v258 = vld [vmem:[#allocation2 + $0x50] sm:$0xff]
      %v259 = vld [vmem:[#allocation2 + $0x58] sm:$0xff]
      %v260 = vld [vmem:[#allocation2 + $0x60] sm:$0xff]
      %v261 = vld [vmem:[#allocation2 + $0x68] sm:$0xff]
      %v262 = vld [vmem:[#allocation2 + $0x70] sm:$0xff]
      %v263 = vld [vmem:[#allocation2 + $0x78] sm:$0xff]
      %v264 = vld [vmem:[%s212] sm:$0xff]
      %v265 = vld [vmem:[%s212 + $0x8] sm:$0xff]
      %v266 = vld [vmem:[%s212 + $0x10] sm:$0xff]
      %v267 = vld [vmem:[%s212 + $0x18] sm:$0xff]
      %v268 = vld [vmem:[%s212 + $0x20] sm:$0xff]
      %v269 = vld [vmem:[%s212 + $0x28] sm:$0xff]
      %v270 = vld [vmem:[%s212 + $0x30] sm:$0xff]
      %v271 = vld [vmem:[%s212 + $0x38] sm:$0xff]
      %v272 = vld [vmem:[%s212 + $0x40] sm:$0xff]
      %v273 = vld [vmem:[%s212 + $0x48] sm:$0xff]
      %v274 = vld [vmem:[%s212 + $0x50] sm:$0xff]
      %v275 = vld [vmem:[%s212 + $0x58] sm:$0xff]
      %v276 = vld [vmem:[%s212 + $0x60] sm:$0xff]
      %v277 = vld [vmem:[%s212 + $0x68] sm:$0xff]
      %v278 = vld [vmem:[%s212 + $0x70] sm:$0xff]
      %v279 = vld [vmem:[%s212 + $0x78] sm:$0xff]
      %v280 = vld [vmem:[%s219] sm:$0xf]
      %v281 = vld [vmem:[%s219 + $0x4] sm:$0xf]
      %v282 = vld [vmem:[%s219 + $0x8] sm:$0xf]
      %v283 = vld [vmem:[%s219 + $0xc] sm:$0xf]
      %v284 = vld [vmem:[%s219 + $0x10] sm:$0xf]
      %v285 = vld [vmem:[%s219 + $0x14] sm:$0xf]
      %v286 = vld [vmem:[%s219 + $0x18] sm:$0xf]
      %v287 = vld [vmem:[%s219 + $0x1c] sm:$0xf]
      %v288 = vld [vmem:[%s219 + $0x20] sm:$0xf]
      %v289 = vld [vmem:[%s219 + $0x24] sm:$0xf]
      %v290 = vld [vmem:[%s219 + $0x28] sm:$0xf]
      %v291 = vld [vmem:[%s219 + $0x2c] sm:$0xf]
      %v292 = vld [vmem:[%s219 + $0x30] sm:$0xf]
      %v293 = vld [vmem:[%s219 + $0x34] sm:$0xf]
      %v294 = vld [vmem:[%s219 + $0x38] sm:$0xf]
      %v295 = vld [vmem:[%s219 + $0x3c] sm:$0xf]
      %v296 = vld [vmem:[%s219 + $0x40] sm:$0xf]
      %v297 = vld [vmem:[%s219 + $0x44] sm:$0xf]
      %v298 = vld [vmem:[%s219 + $0x48] sm:$0xf]
      %v299 = vld [vmem:[%s219 + $0x4c] sm:$0xf]
      %v300 = vld [vmem:[%s219 + $0x50] sm:$0xf]
      %v301 = vld [vmem:[%s219 + $0x54] sm:$0xf]
      %v302 = vld [vmem:[%s219 + $0x58] sm:$0xf]
      %v303 = vld [vmem:[%s219 + $0x5c] sm:$0xf]
      %v304 = vld [vmem:[%s219 + $0x60] sm:$0xf]
      %v305 = vld [vmem:[%s219 + $0x64] sm:$0xf]
      %v306 = vld [vmem:[%s219 + $0x68] sm:$0xf]
      %v307 = vld [vmem:[%s219 + $0x6c] sm:$0xf]
      %v308 = vld [vmem:[%s219 + $0x70] sm:$0xf]
      %v309 = vld [vmem:[%s219 + $0x74] sm:$0xf]
      %v310 = vld [vmem:[%s219 + $0x78] sm:$0xf]
      %v311 = vld [vmem:[%s219 + $0x7c] sm:$0xf]
      %v328 = vunpack.c.l.b16 %v264
      %v329 = vunpack.c.h.b16 %v264
      %v330 = vunpack.c.l.b16 %v265
      %v331 = vunpack.c.h.b16 %v265
      %v332 = vunpack.c.l.b16 %v266
      %v333 = vunpack.c.h.b16 %v266
      %v334 = vunpack.c.l.b16 %v267
      %v335 = vunpack.c.h.b16 %v267
      %v336 = vunpack.c.l.b16 %v268
      %v337 = vunpack.c.h.b16 %v268
      %v338 = vunpack.c.l.b16 %v269
      %v339 = vunpack.c.h.b16 %v269
      %v340 = vunpack.c.l.b16 %v270
      %v341 = vunpack.c.h.b16 %v270
      %v342 = vunpack.c.l.b16 %v271
      %v343 = vunpack.c.h.b16 %v271
      %v344 = vunpack.c.l.b16 %v272
      %v345 = vunpack.c.h.b16 %v272
      %v346 = vunpack.c.l.b16 %v273
      %v347 = vunpack.c.h.b16 %v273
      %v348 = vunpack.c.l.b16 %v274
      %v349 = vunpack.c.h.b16 %v274
      %v350 = vunpack.c.l.b16 %v275
      %v351 = vunpack.c.h.b16 %v275
      %v352 = vunpack.c.l.b16 %v276
      %v353 = vunpack.c.h.b16 %v276
      %v354 = vunpack.c.l.b16 %v277
      %v355 = vunpack.c.h.b16 %v277
      %v356 = vunpack.c.l.b16 %v278
      %v357 = vunpack.c.h.b16 %v278
      %v358 = vunpack.c.l.b16 %v279
      %v359 = vunpack.c.h.b16 %v279
      %v360 = vpack.c.b16 %v330, %v328
      %v361 = vpack.c.b16 %v331, %v329
      %v362 = vpack.c.b16 %v334, %v332
      %v363 = vpack.c.b16 %v335, %v333
      %v364 = vpack.c.b16 %v338, %v336
      %v365 = vpack.c.b16 %v339, %v337
      %v366 = vpack.c.b16 %v342, %v340
      %v367 = vpack.c.b16 %v343, %v341
      %v368 = vpack.c.b16 %v346, %v344
      %v369 = vpack.c.b16 %v347, %v345
      %v370 = vpack.c.b16 %v350, %v348
      %v371 = vpack.c.b16 %v351, %v349
      %v372 = vpack.c.b16 %v354, %v352
      %v373 = vpack.c.b16 %v355, %v353
      %v374 = vpack.c.b16 %v358, %v356
      %v375 = vpack.c.b16 %v359, %v357
      %v424 = vunpack.c.l.b16 %v280
      %v425 = vunpack.c.l.b16 %v281
      %v426 = vunpack.c.l.b16 %v282
      %v427 = vunpack.c.l.b16 %v283
      %v428 = vunpack.c.l.b16 %v284
      %v429 = vunpack.c.l.b16 %v285
      %v430 = vunpack.c.l.b16 %v286
      %v431 = vunpack.c.l.b16 %v287
      %v432 = vunpack.c.l.b16 %v288
      %v433 = vunpack.c.l.b16 %v289
      %v434 = vunpack.c.l.b16 %v290
      %v435 = vunpack.c.l.b16 %v291
      %v436 = vunpack.c.l.b16 %v292
      %v437 = vunpack.c.l.b16 %v293
      %v438 = vunpack.c.l.b16 %v294
      %v439 = vunpack.c.l.b16 %v295
      %v440 = vunpack.c.l.b16 %v296
      %v441 = vunpack.c.l.b16 %v297
      %v442 = vunpack.c.l.b16 %v298
      %v443 = vunpack.c.l.b16 %v299
      %v444 = vunpack.c.l.b16 %v300
      %v445 = vunpack.c.l.b16 %v301
      %v446 = vunpack.c.l.b16 %v302
      %v447 = vunpack.c.l.b16 %v303
      %v448 = vunpack.c.l.b16 %v304
      %v449 = vunpack.c.l.b16 %v305
      %v450 = vunpack.c.l.b16 %v306
      %v451 = vunpack.c.l.b16 %v307
      %v452 = vunpack.c.l.b16 %v308
      %v453 = vunpack.c.l.b16 %v309
      %v454 = vunpack.c.l.b16 %v310
      %v455 = vunpack.c.l.b16 %v311
      %v456 = vpack.c.b16 %v425, %v424
      %v457 = vpack.c.b16 %v427, %v426
      %v458 = vpack.c.b16 %v429, %v428
      %v459 = vpack.c.b16 %v431, %v430
      %v460 = vpack.c.b16 %v433, %v432
      %v461 = vpack.c.b16 %v435, %v434
      %v462 = vpack.c.b16 %v437, %v436
      %v463 = vpack.c.b16 %v439, %v438
      %v464 = vpack.c.b16 %v441, %v440
      %v465 = vpack.c.b16 %v443, %v442
      %v466 = vpack.c.b16 %v445, %v444
      %v467 = vpack.c.b16 %v447, %v446
      %v468 = vpack.c.b16 %v449, %v448
      %v469 = vpack.c.b16 %v451, %v450
      %v470 = vpack.c.b16 %v453, %v452
      %v471 = vpack.c.b16 %v455, %v454
      %488 = vmatprep.subr.bf16.mxu0 0
      %489 = vmatpush1.bf16.msra.mxu0 %v456
      %490 = vmatprep.subr.bf16.mxu0 0
      %491 = vmatpush1.bf16.msra.mxu0 %v457
      %492 = vmatprep.subr.bf16.mxu0 0
      %493 = vmatpush1.bf16.msra.mxu0 %v458
      %494 = vmatprep.subr.bf16.mxu0 0
      %495 = vmatpush1.bf16.msra.mxu0 %v459
      %496 = vmatprep.subr.bf16.mxu0 0
      %497 = vmatpush1.bf16.msra.mxu0 %v460
      %498 = vmatprep.subr.bf16.mxu0 0
      %499 = vmatpush1.bf16.msra.mxu0 %v461
      %500 = vmatprep.subr.bf16.mxu0 0
      %501 = vmatpush1.bf16.msra.mxu0 %v462
      %502 = vmatprep.subr.bf16.mxu0 0
      %503 = vmatpush1.bf16.msra.mxu0 %v463
      %504 = vmatprep.subr.bf16.mxu0 0
      %505 = vmatpush1.bf16.msra.mxu0 %v464
      %506 = vmatprep.subr.bf16.mxu0 0
      %507 = vmatpush1.bf16.msra.mxu0 %v465
      %508 = vmatprep.subr.bf16.mxu0 0
      %509 = vmatpush1.bf16.msra.mxu0 %v466
      %510 = vmatprep.subr.bf16.mxu0 0
      %511 = vmatpush1.bf16.msra.mxu0 %v467
      %512 = vmatprep.subr.bf16.mxu0 0
      %513 = vmatpush1.bf16.msra.mxu0 %v468
      %514 = vmatprep.subr.bf16.mxu0 0
      %515 = vmatpush1.bf16.msra.mxu0 %v469
      %516 = vmatprep.subr.bf16.mxu0 0
      %517 = vmatpush1.bf16.msra.mxu0 %v470
      %518 = vmatprep.subr.bf16.mxu0 0
      %519 = vmatpush1.bf16.msra.mxu0 %v471
      %520 = vmatprep.mubr.bf16.mxu0 %v361
      %521 = vmatmul.mubr.bf16.gmra.mrb[0].mxu0 %v360
      %v522 = vpop.f32.mrb[0].mxu0
      %v523 = vadd.f32 0.0, %v522
      %v524 = vpop.f32.mrb[0].mxu0
      %v525 = vpop.f32.mrb[0].mxu0
      %v526 = vadd.f32 0.0, %v525
      %v527 = vpop.f32.mrb[0].mxu0
      %528 = vmatprep.mubr.bf16.mxu0 %v363
      %529 = vmatmul.mubr.bf16.gmra.mrb[0].mxu0 %v362
      %v530 = vpop.f32.mrb[0].mxu0
      %v531 = vadd.f32 0.0, %v530
      %v532 = vpop.f32.mrb[0].mxu0
      %v533 = vpop.f32.mrb[0].mxu0
      %v534 = vadd.f32 0.0, %v533
      %v535 = vpop.f32.mrb[0].mxu0
      %536 = vmatprep.mubr.bf16.mxu0 %v365
      %537 = vmatmul.mubr.bf16.gmra.mrb[0].mxu0 %v364
      %v538 = vpop.f32.mrb[0].mxu0
      %v539 = vadd.f32 0.0, %v538
      %v540 = vpop.f32.mrb[0].mxu0
      %v541 = vpop.f32.mrb[0].mxu0
      %v542 = vadd.f32 0.0, %v541
      %v543 = vpop.f32.mrb[0].mxu0
      %544 = vmatprep.mubr.bf16.mxu0 %v367
      %545 = vmatmul.mubr.bf16.gmra.mrb[0].mxu0 %v366
      %v546 = vpop.f32.mrb[0].mxu0
      %v547 = vadd.f32 0.0, %v546
      %v548 = vpop.f32.mrb[0].mxu0
      %v549 = vpop.f32.mrb[0].mxu0
      %v550 = vadd.f32 0.0, %v549
      %v551 = vpop.f32.mrb[0].mxu0
      %552 = vmatprep.mubr.bf16.mxu0 %v369
      %553 = vmatmul.mubr.bf16.gmra.mrb[0].mxu0 %v368
      %v554 = vpop.f32.mrb[0].mxu0
      %v555 = vadd.f32 0.0, %v554
      %v556 = vpop.f32.mrb[0].mxu0
      %v557 = vpop.f32.mrb[0].mxu0
      %v558 = vadd.f32 0.0, %v557
      %v559 = vpop.f32.mrb[0].mxu0
      %560 = vmatprep.mubr.bf16.mxu0 %v371
      %561 = vmatmul.mubr.bf16.gmra.mrb[0].mxu0 %v370
      %v562 = vpop.f32.mrb[0].mxu0
      %v563 = vadd.f32 0.0, %v562
      %v564 = vpop.f32.mrb[0].mxu0
      %v565 = vpop.f32.mrb[0].mxu0
      %v566 = vadd.f32 0.0, %v565
      %v567 = vpop.f32.mrb[0].mxu0
      %568 = vmatprep.mubr.bf16.mxu0 %v373
      %569 = vmatmul.mubr.bf16.gmra.mrb[0].mxu0 %v372
      %v570 = vpop.f32.mrb[0].mxu0
      %v571 = vadd.f32 0.0, %v570
      %v572 = vpop.f32.mrb[0].mxu0
      %v573 = vpop.f32.mrb[0].mxu0
      %v574 = vadd.f32 0.0, %v573
      %v575 = vpop.f32.mrb[0].mxu0
      %576 = vmatprep.mubr.bf16.mxu0 %v375
      %577 = vmatmul.mubr.bf16.gmra.mrb[0].mxu0 %v374
      %v578 = vpop.f32.mrb[0].mxu0
      %v579 = vadd.f32 0.0, %v578
      %v580 = vpop.f32.mrb[0].mxu0
      %v581 = vpop.f32.mrb[0].mxu0
      %v582 = vadd.f32 0.0, %v581
      %v583 = vpop.f32.mrb[0].mxu0
      %584 = vdwg.mxu0
      %v585 = vadd.f32 %v248, %v523
      %v586 = vadd.f32 %v249, %v526
      %v587 = vadd.f32 %v250, %v531
      %v588 = vadd.f32 %v251, %v534
      %v589 = vadd.f32 %v252, %v539
      %v590 = vadd.f32 %v253, %v542
      %v591 = vadd.f32 %v254, %v547
      %v592 = vadd.f32 %v255, %v550
      %v593 = vadd.f32 %v256, %v555
      %v594 = vadd.f32 %v257, %v558
      %v595 = vadd.f32 %v258, %v563
      %v596 = vadd.f32 %v259, %v566
      %v597 = vadd.f32 %v260, %v571
      %v598 = vadd.f32 %v261, %v574
      %v599 = vadd.f32 %v262, %v579
      %v600 = vadd.f32 %v263, %v582
      %601 = vst [vmem:[#allocation2] sm:$0xff] %v585
      %602 = vst [vmem:[#allocation2 + $0x8] sm:$0xff] %v586
      %603 = vst [vmem:[#allocation2 + $0x10] sm:$0xff] %v587
      %604 = vst [vmem:[#allocation2 + $0x18] sm:$0xff] %v588
      %605 = vst [vmem:[#allocation2 + $0x20] sm:$0xff] %v589
      %606 = vst [vmem:[#allocation2 + $0x28] sm:$0xff] %v590
      %607 = vst [vmem:[#allocation2 + $0x30] sm:$0xff] %v591
      %608 = vst [vmem:[#allocation2 + $0x38] sm:$0xff] %v592
      %609 = vst [vmem:[#allocation2 + $0x40] sm:$0xff] %v593
      %610 = vst [vmem:[#allocation2 + $0x48] sm:$0xff] %v594
      %611 = vst [vmem:[#allocation2 + $0x50] sm:$0xff] %v595
      %612 = vst [vmem:[#allocation2 + $0x58] sm:$0xff] %v596
      %613 = vst [vmem:[#allocation2 + $0x60] sm:$0xff] %v597
      %614 = vst [vmem:[#allocation2 + $0x68] sm:$0xff] %v598
      %615 = vst [vmem:[#allocation2 + $0x70] sm:$0xff] %v599
      %616 = vst [vmem:[#allocation2 + $0x78] sm:$0xff] %v600
      // Predicated region
      $region37: #{_lambda_.5} parent=31 // pred_check
        %p617 = pneg %p228
      $region38: #{_lambda_.5} parent=31 // pred_check_branch
        %619 = sbr.rel (%p617) target = $region40
      $region39: #{_lambda_.5} parent=31 // pred_region
        %v620 = vld [vmem:[#allocation2] sm:$0xff]
        %v621 = vld [vmem:[#allocation2 + $0x8] sm:$0xff]
        %v622 = vld [vmem:[#allocation2 + $0x10] sm:$0xff]
        %v623 = vld [vmem:[#allocation2 + $0x18] sm:$0xff]
        %v624 = vld [vmem:[#allocation2 + $0x20] sm:$0xff]
        %v625 = vld [vmem:[#allocation2 + $0x28] sm:$0xff]
        %v626 = vld [vmem:[#allocation2 + $0x30] sm:$0xff]
        %v627 = vld [vmem:[#allocation2 + $0x38] sm:$0xff]
        %v628 = vld [vmem:[#allocation2 + $0x40] sm:$0xff]
        %v629 = vld [vmem:[#allocation2 + $0x48] sm:$0xff]
        %v630 = vld [vmem:[#allocation2 + $0x50] sm:$0xff]
        %v631 = vld [vmem:[#allocation2 + $0x58] sm:$0xff]
        %v632 = vld [vmem:[#allocation2 + $0x60] sm:$0xff]
        %v633 = vld [vmem:[#allocation2 + $0x68] sm:$0xff]
        %v634 = vld [vmem:[#allocation2 + $0x70] sm:$0xff]
        %v635 = vld [vmem:[#allocation2 + $0x78] sm:$0xff]
        %v636 = vld [vmem:[%s2] sm:$0x1]
        %v638 = vlaneseq
        %v639 = vshrl.u32 %v638, 7
        %v640 = vsub.s32 0, %v639
        %v641 = vrot.slane %v636, %v640
        %v643 = vadd.f32 %v620, %v641
        %v644 = vadd.f32 %v621, %v641
        %v645 = vadd.f32 %v622, %v641
        %v646 = vadd.f32 %v623, %v641
        %v647 = vadd.f32 %v624, %v641
        %v648 = vadd.f32 %v625, %v641
        %v649 = vadd.f32 %v626, %v641
        %v650 = vadd.f32 %v627, %v641
        %v651 = vadd.f32 %v628, %v641
        %v652 = vadd.f32 %v629, %v641
        %v653 = vadd.f32 %v630, %v641
        %v654 = vadd.f32 %v631, %v641
        %v655 = vadd.f32 %v632, %v641
        %v656 = vadd.f32 %v633, %v641
        %v657 = vadd.f32 %v634, %v641
        %v658 = vadd.f32 %v635, %v641
        %659 = vst [vmem:[%s225] sm:$0xff] %v643
        %660 = vst [vmem:[%s225 + $0x8] sm:$0xff] %v644
        %661 = vst [vmem:[%s225 + $0x10] sm:$0xff] %v645
        %662 = vst [vmem:[%s225 + $0x18] sm:$0xff] %v646
        %663 = vst [vmem:[%s225 + $0x20] sm:$0xff] %v647
        %664 = vst [vmem:[%s225 + $0x28] sm:$0xff] %v648
        %665 = vst [vmem:[%s225 + $0x30] sm:$0xff] %v649
        %666 = vst [vmem:[%s225 + $0x38] sm:$0xff] %v650
        %667 = vst [vmem:[%s225 + $0x40] sm:$0xff] %v651
        %668 = vst [vmem:[%s225 + $0x48] sm:$0xff] %v652
        %669 = vst [vmem:[%s225 + $0x50] sm:$0xff] %v653
        %670 = vst [vmem:[%s225 + $0x58] sm:$0xff] %v654
        %671 = vst [vmem:[%s225 + $0x60] sm:$0xff] %v655
        %672 = vst [vmem:[%s225 + $0x68] sm:$0xff] %v656
        %673 = vst [vmem:[%s225 + $0x70] sm:$0xff] %v657
        %674 = vst [vmem:[%s225 + $0x78] sm:$0xff] %v658
      $region40: #{_lambda_.5} parent=31 // pred_fallthru
        _
      %s675 = smul.u32 16, %s18
      %p676 = scmp.lt.s32.totalorder %s675, 31
      %s677 = scalar_select %p676, %s675, 31
      %s678 = smul.addr %s677, 8
      %s679 = scalar_lea.vmem %s3, %s678
      // Predicated region
      $region41: #{_lambda_.5} parent=31 // pred_check
        %p680 = pneg %p119
      $region42: #{_lambda_.5} parent=31 // pred_check_branch
        %682 = sbr.rel (%p680) target = $region44
      $region43: #{_lambda_.5} parent=31 // pred_region
        %s683 = smul.u32 16, %s18
      $region44: #{_lambda_.5} parent=31 // pred_fallthru
        _
    $region32: #{_lambda_.5} parent=5 // pred_fallthru
      _
    %p684 = scmp.le.s32.totalorder 2, %s9
    // Predicated region
    $region45: #{_lambda_.5} parent=5 // pred_check
      %p685 = pneg %p684
    $region46: #{_lambda_.5} parent=5 // pred_check_branch
      %687 = sbr.rel (%p685) target = $region48
    $region47: #{_lambda_.5} parent=5 // pred_region
      %s688 = ssub.s32 %s9, 2
      // Predicated region
      $region49: #{_lambda_.5} parent=47 // pred_check
        %p689 = pneg %p125
      $region50: #{_lambda_.5} parent=47 // pred_check_branch
        %691 = sbr.rel (%p689) target = $region52
      $region51: #{_lambda_.5} parent=47 // pred_region
        %s692 = smul.u32 16, %s20
        %p693 = scmp.lt.s32.totalorder %s692, 31
        %s694 = scalar_select %p693, %s692, 31
        %s695 = smul.addr %s694, 8
        %s696 = scalar_lea.vmem %s3, %s695
      $region52: #{_lambda_.5} parent=47 // pred_fallthru
        _
    $region48: #{_lambda_.5} parent=5 // pred_fallthru
      _
  $region6: #{_lambda_.5} parent=0 // loop_footer
    %s13 = sadd.s32 1, %s9
  $region7: #{_lambda_.5} parent=0 // loop_footer_branch
    %8 = sbr.rel target = $region3
  $region8: #{_lambda_.5} parent=0 // loop_exit
    _

</llo_original>
